<compile_context>
chip_gen: v7x
topology: tpu7x:2x2x1
jax: 0.10.0
libtpu: 0.0.40
codegen_flags: <defaults>
</compile_context>

<pallas_src>
import functools
import math

import jax
import jax.numpy as jnp
from jax import lax
from jax.experimental import pallas as pl
from jax.experimental.pallas import tpu as pltpu

_SUBLANE = {4: 8, 2: 16, 1: 32}   # sublane tile per itemsize
_MAX_PACKED_LANES = 512           # cap on pack*C (mask stays small & resident)


# ------------------------------ device tuning ------------------------------ #

@functools.lru_cache(maxsize=1)
def _device_tuning():
    """(target block bytes, min parallel grid steps) for the local TPU generation."""
    try:
        kind = jax.devices()[0].device_kind.lower()
    except Exception:  # pragma: no cover - defensive
        kind = ""
    if "v7" in kind:
        return 4 << 20, 2          # big blocks; feed both TensorCores
    if "v5e" in kind or "v5 lite" in kind or "v5lite" in kind:
        return 1 << 20, 1          # smaller scoped-VMEM default on v5e
    return 2 << 20, 1              # v6e / default


def _round_up(v, m):
    return ((v + m - 1) // m) * m


def _pick_block(total, bytes_per_unit, align, target_bytes):
    """Largest `align`-aligned block near target_bytes; full extent if smaller."""
    blk = max(align, (target_bytes // max(bytes_per_unit, 1)) // align * align)
    return total if total <= blk else blk


# --------------------------------- kernels --------------------------------- #

def _ln_rows_packed_kernel(x_ref, m_ref, w_ref, b_ref, o_ref, *, eps, c, n_split):
    """channels_last, lane-dense: P = PC//C rows packed per PC-lane row.

    Per-C-lane-segment sums are computed with bf16 MXU matmuls against a
    constant block-diagonal 0/1 mask.  x (and x*x) are split into `n_split`
    bf16 terms so every matmul is a single native MXU pass while the segmented
    sums stay exact to f32 accumulation (same accuracy as a HIGHEST f32 dot at
    roughly half the passes and no internal split scratch).
    """
    x = x_ref[...].astype(jnp.float32)                        # (TM, PC)
    m = m_ref[...]                                            # (PC, PC) bf16 0/1 block-diag

    def segsum(v):
        s = None
        r = v
        for t in range(n_split):
            h = r.astype(jnp.bfloat16)
            p = jnp.dot(h, m, preferred_element_type=jnp.float32)
            s = p if s is None else s + p
            if t + 1 < n_split:
                r = r - h.astype(jnp.float32)
        return s

    inv_c = 1.0 / float(c)
    # The two segmented sums are independent -> MXU work issues back-to-back.
    sum_x = segsum(x)
    sum_xx = segsum(x * x)
    mu = sum_x * inv_c
    # One-pass variance: E[x^2] - mu^2.  With exact segmented sums the only
    # residual risk is cancellation when |mean| >> std; clamp at 0 (eps keeps
    # rsqrt finite).  Padded tail rows may carry garbage but rows are fully
    # independent and their writeback is dropped.
    var = jnp.maximum(sum_xx * inv_c - mu * mu, 0.0)
    inv = lax.rsqrt(var + eps)
    w = w_ref[...].astype(jnp.float32)                        # (1, PC) tiled gamma
    b = b_ref[...].astype(jnp.float32)                        # (1, PC) tiled beta
    o_ref[...] = ((x - mu) * (inv * w) + b).astype(o_ref.dtype)


def _ln_rows_kernel(x_ref, w_ref, b_ref, o_ref, *, eps):
    """channels_last fallback (C does not pack cleanly): reduce over lanes."""
    x = x_ref[...].astype(jnp.float32)                        # (TM, C)
    mu = jnp.mean(x, axis=-1, keepdims=True)
    d = x - mu
    var = jnp.mean(d * d, axis=-1, keepdims=True)             # biased variance
    inv = lax.rsqrt(var + eps)
    w = w_ref[...].astype(jnp.float32)
    b = b_ref[...].astype(jnp.float32)
    o_ref[...] = (d * (inv * w) + b).astype(o_ref.dtype)


def _ln_cfirst_kernel(x_ref, w_ref, b_ref, o_ref, *, eps):
    """channels_first: reduce over the sublane (C) axis; flattened spatial axis is
    lane-dense.  Avoids the two full-tensor HBM transposes of a layout round trip."""
    x = x_ref[...].astype(jnp.float32)                        # (1, C, TS)
    mu = jnp.mean(x, axis=1, keepdims=True)                   # (1, 1, TS)
    d = x - mu
    var = jnp.mean(d * d, axis=1, keepdims=True)
    inv = lax.rsqrt(var + eps)
    w = w_ref[...].astype(jnp.float32)[None]                  # (1, C, 1)
    b = b_ref[...].astype(jnp.float32)[None]
    o_ref[...] = (d * (inv * w) + b).astype(o_ref.dtype)


# --------------------------------- drivers --------------------------------- #

def _layer_norm_rows(x2d, weight, bias, eps, row_block=None):
    """LayerNorm over the last dim of an (N, C) array."""
    n, c = x2d.shape
    dtype = x2d.dtype
    itemsize = dtype.itemsize
    sub = _SUBLANE.get(itemsize, 8)
    target_bytes, min_steps = _device_tuning()

    # Lane-dense repacking: pack = lcm(C,128)//C rows per (pack*C)-lane row
    # (free, contiguous reshape).  Covers C=32 (pc=128) and C=48 (pc=384) etc.
    pack = 1
    if c < 128:
        p = (c * 128 // math.gcd(c, 128)) // c
        if p > 1 and (n % p) == 0 and p * c <= _MAX_PACKED_LANES:
            pack = p
    pc = pack * c
    rows = n // pack
    xp = x2d.reshape(rows, pc)
    wp = jnp.tile(weight.reshape(1, c), (1, pack))
    bp = jnp.tile(bias.reshape(1, c), (1, pack))

    if row_block is not None:
        tm = min(rows, _round_up(int(row_block), sub))        # keep sublane-aligned
    else:
        tm = _pick_block(rows, pc * itemsize, sub, target_bytes)
    if min_steps > 1 and rows >= 2 * sub:
        # v7x: make sure the parallel axis has >= min_steps so both TCs stream.
        tm = min(tm, _round_up(-(-rows // min_steps), sub))
    grid = (pl.cdiv(rows, tm),)

    if pack > 1:
        # number of bf16 split terms needed for exact f32-accumulated sums
        if dtype == jnp.bfloat16:
            n_split = 1
        elif itemsize <= 2:
            n_split = 2
        else:
            n_split = 3
        seg = jnp.arange(pc, dtype=jnp.int32) // c
        mmat = (seg[:, None] == seg[None, :]).astype(jnp.bfloat16)  # block-diag ones
        kernel = functools.partial(_ln_rows_packed_kernel, eps=eps, c=c,
                                   n_split=n_split)
        in_specs = [
            pl.BlockSpec((tm, pc), lambda i: (i, 0)),
            pl.BlockSpec((pc, pc), lambda i: (0, 0)),   # constant block -> stays resident
            pl.BlockSpec((1, pc), lambda i: (0, 0)),
            pl.BlockSpec((1, pc), lambda i: (0, 0)),
        ]
        operands = (xp, mmat, wp, bp)
        flops = int(2 * n_split * 2 * rows * pc * pc + 20 * n * c)
        bytes_accessed = int(2 * n * c * itemsize + 2 * pc * pc)
    else:
        kernel = functools.partial(_ln_rows_kernel, eps=eps)
        in_specs = [
            pl.BlockSpec((tm, pc), lambda i: (i, 0)),
            pl.BlockSpec((1, pc), lambda i: (0, 0)),
            pl.BlockSpec((1, pc), lambda i: (0, 0)),
        ]
        operands = (xp, wp, bp)
        flops = int(10 * n * c)
        bytes_accessed = int(2 * n * c * itemsize)

    yp = pl.pallas_call(
        kernel,
        out_shape=jax.ShapeDtypeStruct((rows, pc), dtype),
        grid_spec=pltpu.PrefetchScalarGridSpec(
            num_scalar_prefetch=0,
            grid=grid,
            in_specs=in_specs,
            out_specs=pl.BlockSpec((tm, pc), lambda i: (i, 0)),
        ),
        compiler_params=pltpu.CompilerParams(dimension_semantics=("parallel",)),
        cost_estimate=pl.CostEstimate(
            flops=flops,
            transcendentals=int(n * c),
            bytes_accessed=bytes_accessed,
        ),
    )(*operands)
    return yp.reshape(n, c)


def _layer_norm_channels_first(x3, weight, bias, eps, col_block=None):
    """LayerNorm over dim 1 of a (B, C, S) array (no transposes)."""
    b, c, s = x3.shape
    dtype = x3.dtype
    itemsize = dtype.itemsize
    target_bytes, min_steps = _device_tuning()

    if col_block is not None:
        ts = min(s, _round_up(int(col_block), 128))           # keep lane-aligned
    else:
        ts = _pick_block(s, c * itemsize, 128, target_bytes)
    if b < min_steps and s >= 2 * 128:
        # v7x: if batch alone can't occupy both TCs, split the spatial axis.
        ts = min(ts, _round_up(-(-s // -(-min_steps // b)), 128))
    grid = (b, pl.cdiv(s, ts))

    w2 = weight.reshape(c, 1)
    b2 = bias.reshape(c, 1)
    kernel = functools.partial(_ln_cfirst_kernel, eps=eps)
    return pl.pallas_call(
        kernel,
        out_shape=jax.ShapeDtypeStruct((b, c, s), dtype),
        grid_spec=pltpu.PrefetchScalarGridSpec(
            num_scalar_prefetch=0,
            grid=grid,
            in_specs=[
                pl.BlockSpec((1, c, ts), lambda i, j: (i, 0, j)),
                pl.BlockSpec((c, 1), lambda i, j: (0, 0)),
                pl.BlockSpec((c, 1), lambda i, j: (0, 0)),
            ],
            out_specs=pl.BlockSpec((1, c, ts), lambda i, j: (i, 0, j)),
        ),
        compiler_params=pltpu.CompilerParams(
            dimension_semantics=("parallel", "parallel")),
        cost_estimate=pl.CostEstimate(
            flops=int(10 * b * c * s),
            transcendentals=int(b * s),
            bytes_accessed=int(2 * b * c * s * itemsize),
        ),
    )(x3, w2, b2)


def layer_norm(x, weight, bias, eps=1e-6, data_format="channels_last",
               row_block=None, col_block=None):
    """Forward pass matching the PyTorch LayerNorm module (both data formats)."""
    if data_format not in ("channels_last", "channels_first"):
        raise NotImplementedError

    if data_format == "channels_last":
        c = x.shape[-1]
        lead = x.shape[:-1]
        y2d = _layer_norm_rows(x.reshape(-1, c), weight, bias, eps, row_block=row_block)
        return y2d.reshape(*lead, c)

    # channels_first: (B, C, *spatial), normalize over dim 1 — no transposes.
    b, c = x.shape[0], x.shape[1]
    s = 1
    for d in x.shape[2:]:
        s *= d
    y3 = _layer_norm_channels_first(x.reshape(b, c, s), weight, bias, eps,
                                    col_block=col_block)
    return y3.reshape(x.shape)


# ------------------------------- references -------------------------------- #

def _ref_channels_last(x, w, b, eps):
    mu = jnp.mean(x, axis=-1, keepdims=True)
    var = jnp.mean((x - mu) ** 2, axis=-1, keepdims=True)
    return (x - mu) / jnp.sqrt(var + eps) * w + b


def _ref_channels_first(x, w, b, eps):
    u = jnp.mean(x, axis=1, keepdims=True)
    s = jnp.mean((x - u) ** 2, axis=1, keepdims=True)
    xn = (x - u) / jnp.sqrt(s + eps)
    shape = (1, -1) + (1,) * (x.ndim - 2)
    return w.reshape(shape) * xn + b.reshape(shape)


if __name__ == "__main__":
    key = jax.random.PRNGKey(0)
    ks = jax.random.split(key, 10)
    eps = 1e-6

    # --- channels_last, C=32: packed lane-dense path (pc=128) ---
    C = 32
    w = jax.random.normal(ks[0], (C,), jnp.float32)
    b = jax.random.normal(ks[1], (C,), jnp.float32)
    x = jax.random.normal(ks[2], (2, 8, 8, 8, C), jnp.float32)
    y = jax.block_until_ready(layer_norm(x, w, b, eps, "channels_last"))
    assert jnp.allclose(y, _ref_channels_last(x, w, b, eps), atol=2e-5, rtol=2e-5)

    # --- channels_last, C=32: packed path, non-dividing grid (padded tail block) ---
    x = jax.random.normal(ks[3], (2, 5, 8, 8, C), jnp.float32)     # 640 rows -> 160 packed
    y = jax.block_until_ready(layer_norm(x, w, b, eps, "channels_last", row_block=64))
    assert jnp.allclose(y, _ref_channels_last(x, w, b, eps), atol=2e-5, rtol=2e-5)

    # --- channels_last, C=48: now lane-dense too (pack=8, pc=384) ---
    C2 = 48
    w2 = jax.random.normal(ks[4], (C2,), jnp.float32)
    b2 = jax.random.normal(ks[5], (C2,), jnp.float32)
    x2 = jax.random.normal(ks[6], (2, 4, 4, 4, C2), jnp.float32)
    y2 = jax.block_until_ready(layer_norm(x2, w2, b2, eps, "channels_last"))
    assert jnp.allclose(y2, _ref_channels_last(x2, w2, b2, eps), atol=2e-5, rtol=2e-5)

    # --- channels_last, bf16 input: single-split packed path ---
    xb = jax.random.normal(ks[9], (2, 8, 8, 8, C), jnp.float32).astype(jnp.bfloat16)
    yb = jax.block_until_ready(layer_norm(xb, w, b, eps, "channels_last"))
    yb_ref = _ref_channels_last(xb.astype(jnp.float32), w, b, eps)
    assert jnp.allclose(yb.astype(jnp.float32), yb_ref, atol=2e-2, rtol=2e-2)

    # --- channels_first, C=32: sublane-reduction kernel, no transposes ---
    xf = jax.random.normal(ks[7], (2, C, 8, 8, 8), jnp.float32)
    yf = jax.block_until_ready(layer_norm(xf, w, b, eps, "channels_first"))
    assert jnp.allclose(yf, _ref_channels_first(xf, w, b, eps), atol=2e-5, rtol=2e-5)

    # --- channels_first: non-dividing spatial grid (padded tail block) ---
    xf2 = jax.random.normal(ks[8], (2, C, 8, 8, 5), jnp.float32)   # S = 320
    yf2 = jax.block_until_ready(
        layer_norm(xf2, w, b, eps, "channels_first", col_block=128))
    assert jnp.allclose(yf2, _ref_channels_first(xf2, w, b, eps), atol=2e-5, rtol=2e-5)

    print("KERNEL_OK")
</pallas_src>

<mosaic_0001>
module attributes {stable_mosaic.version = 11 : i64} {
  func.func @_ln_rows_packed_kernel(%arg0: i32, %arg1: memref<256x128xf32, #tpu.memory_space<vmem>>, %arg2: memref<128x128xbf16, #tpu.memory_space<vmem>>, %arg3: memref<1x128xf32, #tpu.memory_space<vmem>>, %arg4: memref<1x128xf32, #tpu.memory_space<vmem>>, %arg5: memref<256x128xf32, #tpu.memory_space<vmem>>) attributes {dimension_semantics = [#tpu.dimension_semantics<parallel>], iteration_bounds = array<i64: 1>, scalar_prefetch = 0 : i64, scratch_operands = 0 : i64, tpu.core_type = #tpu.core_type<tc>, window_params = [{transform_indices = @transform_0, window_bounds = array<i64: 256, 128>}, {pipeline_mode = #tpu.pipeline_mode<synchronous>, transform_indices = @transform_1, window_bounds = array<i64: 128, 128>}, {pipeline_mode = #tpu.pipeline_mode<synchronous>, transform_indices = @transform_2, window_bounds = array<i64: 1, 128>}, {pipeline_mode = #tpu.pipeline_mode<synchronous>, transform_indices = @transform_3, window_bounds = array<i64: 1, 128>}, {transform_indices = @transform_4, window_bounds = array<i64: 256, 128>}]} {
    %c0 = arith.constant 0 : index
    %c0_0 = arith.constant 0 : index
    %0 = vector.load %arg1[%c0, %c0_0] : memref<256x128xf32, #tpu.memory_space<vmem>>, vector<256x128xf32>
    %c0_1 = arith.constant 0 : index
    %c0_2 = arith.constant 0 : index
    %1 = vector.load %arg2[%c0_1, %c0_2] : memref<128x128xbf16, #tpu.memory_space<vmem>>, vector<128x128xbf16>
    %2 = arith.truncf %0 : vector<256x128xf32> to vector<256x128xbf16>
    %cst = arith.constant dense<0.000000e+00> : vector<256x128xf32>
    %3 = tpu.matmul %2, %1, %cst {dimension_numbers = #tpu.dot_dimension_numbers<[1], [0], [0], [1], [0, 0, 1, 1], [], []>} : vector<256x128xbf16>, vector<128x128xbf16>, vector<256x128xf32> -> vector<256x128xf32>
    %4 = arith.extf %2 : vector<256x128xbf16> to vector<256x128xf32>
    %5 = arith.subf %0, %4 : vector<256x128xf32>
    %6 = arith.truncf %5 : vector<256x128xf32> to vector<256x128xbf16>
    %cst_3 = arith.constant dense<0.000000e+00> : vector<256x128xf32>
    %7 = tpu.matmul %6, %1, %cst_3 {dimension_numbers = #tpu.dot_dimension_numbers<[1], [0], [0], [1], [0, 0, 1, 1], [], []>} : vector<256x128xbf16>, vector<128x128xbf16>, vector<256x128xf32> -> vector<256x128xf32>
    %8 = arith.addf %3, %7 : vector<256x128xf32>
    %9 = arith.extf %6 : vector<256x128xbf16> to vector<256x128xf32>
    %10 = arith.subf %5, %9 : vector<256x128xf32>
    %11 = arith.truncf %10 : vector<256x128xf32> to vector<256x128xbf16>
    %cst_4 = arith.constant dense<0.000000e+00> : vector<256x128xf32>
    %12 = tpu.matmul %11, %1, %cst_4 {dimension_numbers = #tpu.dot_dimension_numbers<[1], [0], [0], [1], [0, 0, 1, 1], [], []>} : vector<256x128xbf16>, vector<128x128xbf16>, vector<256x128xf32> -> vector<256x128xf32>
    %13 = arith.addf %8, %12 : vector<256x128xf32>
    %14 = arith.mulf %0, %0 : vector<256x128xf32>
    %15 = arith.truncf %14 : vector<256x128xf32> to vector<256x128xbf16>
    %cst_5 = arith.constant dense<0.000000e+00> : vector<256x128xf32>
    %16 = tpu.matmul %15, %1, %cst_5 {dimension_numbers = #tpu.dot_dimension_numbers<[1], [0], [0], [1], [0, 0, 1, 1], [], []>} : vector<256x128xbf16>, vector<128x128xbf16>, vector<256x128xf32> -> vector<256x128xf32>
    %17 = arith.extf %15 : vector<256x128xbf16> to vector<256x128xf32>
    %18 = arith.subf %14, %17 : vector<256x128xf32>
    %19 = arith.truncf %18 : vector<256x128xf32> to vector<256x128xbf16>
    %cst_6 = arith.constant dense<0.000000e+00> : vector<256x128xf32>
    %20 = tpu.matmul %19, %1, %cst_6 {dimension_numbers = #tpu.dot_dimension_numbers<[1], [0], [0], [1], [0, 0, 1, 1], [], []>} : vector<256x128xbf16>, vector<128x128xbf16>, vector<256x128xf32> -> vector<256x128xf32>
    %21 = arith.addf %16, %20 : vector<256x128xf32>
    %22 = arith.extf %19 : vector<256x128xbf16> to vector<256x128xf32>
    %23 = arith.subf %18, %22 : vector<256x128xf32>
    %24 = arith.truncf %23 : vector<256x128xf32> to vector<256x128xbf16>
    %cst_7 = arith.constant dense<0.000000e+00> : vector<256x128xf32>
    %25 = tpu.matmul %24, %1, %cst_7 {dimension_numbers = #tpu.dot_dimension_numbers<[1], [0], [0], [1], [0, 0, 1, 1], [], []>} : vector<256x128xbf16>, vector<128x128xbf16>, vector<256x128xf32> -> vector<256x128xf32>
    %26 = arith.addf %21, %25 : vector<256x128xf32>
    %cst_8 = arith.constant 3.125000e-02 : f32
    %27 = vector.broadcast %cst_8 : f32 to vector<256x128xf32>
    %28 = arith.mulf %13, %27 : vector<256x128xf32>
    %cst_9 = arith.constant 3.125000e-02 : f32
    %29 = vector.broadcast %cst_9 : f32 to vector<256x128xf32>
    %30 = arith.mulf %26, %29 : vector<256x128xf32>
    %31 = arith.mulf %28, %28 : vector<256x128xf32>
    %32 = arith.subf %30, %31 : vector<256x128xf32>
    %cst_10 = arith.constant 0.000000e+00 : f32
    %33 = vector.broadcast %cst_10 : f32 to vector<256x128xf32>
    %34 = arith.maximumf %32, %33 : vector<256x128xf32>
    %cst_11 = arith.constant 9.99999997E-7 : f32
    %35 = vector.broadcast %cst_11 : f32 to vector<256x128xf32>
    %36 = arith.addf %34, %35 : vector<256x128xf32>
    %37 = math.rsqrt %36 : vector<256x128xf32>
    %c0_12 = arith.constant 0 : index
    %c0_13 = arith.constant 0 : index
    %38 = vector.load %arg3[%c0_12, %c0_13] : memref<1x128xf32, #tpu.memory_space<vmem>>, vector<1x128xf32>
    %c0_14 = arith.constant 0 : index
    %c0_15 = arith.constant 0 : index
    %39 = vector.load %arg4[%c0_14, %c0_15] : memref<1x128xf32, #tpu.memory_space<vmem>>, vector<1x128xf32>
    %40 = arith.subf %0, %28 : vector<256x128xf32>
    %41 = vector.broadcast %38 : vector<1x128xf32> to vector<256x128xf32>
    %42 = arith.mulf %37, %41 : vector<256x128xf32>
    %43 = arith.mulf %40, %42 : vector<256x128xf32>
    %44 = vector.broadcast %39 : vector<1x128xf32> to vector<256x128xf32>
    %45 = arith.addf %43, %44 : vector<256x128xf32>
    %c0_16 = arith.constant 0 : index
    %c0_17 = arith.constant 0 : index
    %46 = vector.load %arg5[%c0_16, %c0_17] : memref<256x128xf32, #tpu.memory_space<vmem>>, vector<256x128xf32>
    tpu.vector_store %arg5[%c0_16, %c0_17], %45 {strides = array<i32>} : memref<256x128xf32, #tpu.memory_space<vmem>>, vector<256x128xf32>,
    return
  }
  func.func @transform_0(%arg0: i32) -> (i32, i32) {
    %c0_i32 = arith.constant 0 : i32
    %c0_i32_0 = arith.constant 0 : i32
    return %arg0, %c0_i32 : i32, i32
  }
  func.func @transform_1(%arg0: i32) -> (i32, i32) {
    %c0_i32 = arith.constant 0 : i32
    %c0_i32_0 = arith.constant 0 : i32
    %c0_i32_1 = arith.constant 0 : i32
    return %c0_i32, %c0_i32_0 : i32, i32
  }
  func.func @transform_2(%arg0: i32) -> (i32, i32) {
    %c0_i32 = arith.constant 0 : i32
    %c0_i32_0 = arith.constant 0 : i32
    %c0_i32_1 = arith.constant 0 : i32
    return %c0_i32, %c0_i32_0 : i32, i32
  }
  func.func @transform_3(%arg0: i32) -> (i32, i32) {
    %c0_i32 = arith.constant 0 : i32
    %c0_i32_0 = arith.constant 0 : i32
    %c0_i32_1 = arith.constant 0 : i32
    return %c0_i32, %c0_i32_0 : i32, i32
  }
  func.func @transform_4(%arg0: i32) -> (i32, i32) {
    %c0_i32 = arith.constant 0 : i32
    %c0_i32_0 = arith.constant 0 : i32
    return %arg0, %c0_i32 : i32, i32
  }
}

</mosaic_0001>

<llo_original>
// kernel: tpu_custom_call.1
$region0: #{tpu_custom_call.1}
  #allocation0 [shape = 'u32[]', space=smem, size = 0x4, offset = 0x4, fixed_abs, tag = 'smem constant byte address 0x4 - core index']
  #allocation1 [shape = 'u32[144,128]{1,0:T(1,128)}', space=vmem, size = 0x12000, scoped, tag = 'internal scratch']
  %s0 = inlined_call_operand.hbm [shape: f32[256,128], index: 0, kind: input, shape index: {}]
  %s1 = inlined_call_operand.hbm [shape: bf16[128,128], index: 1, kind: input, shape index: {}]
  %s2 = inlined_call_operand.vmem [shape: f32[1,128], index: 2, kind: input, shape index: {}]
  %s3 = inlined_call_operand.vmem [shape: f32[1,128], index: 3, kind: input, shape index: {}]
  %s4 = inlined_call_operand.hbm [shape: f32[256,128], index: 4, kind: output, shape index: {}]
  %s5 = sld [smem:[#allocation0]]
  $region34: #{tpu_custom_call.1} parent=0
    _
  %s7 = ssub.s32 1, %s5
  %s8 = scalar_select 0, %s7, %s5
  $region1: #{tpu_custom_call.1} parent=0
    #allocation2 [shape = 'u8[131072]{0}', space=vmem, size = 0x20000, scoped, tag = 'input window, operand 0, single buffered']
    #allocation3 [shape = 's32[1]{0}', space=sflag, size = 0x4, scoped, tag = 'scoped memory for tpu_custom_call.1']
    #allocation4 [shape = 's32[1]{0}', space=sflag, size = 0x4, scoped, tag = 'scoped memory for tpu_custom_call.1']
    #allocation5 [shape = 'u8[32768]{0}', space=vmem, size = 0x8000, scoped, tag = 'input window, operand 1, single buffered']
    #allocation6 [shape = 's32[1]{0}', space=sflag, size = 0x4, scoped, tag = 'scoped memory for tpu_custom_call.1']
    #allocation7 [shape = 'u8[131072]{0}', space=vmem, size = 0x20000, scoped, tag = 'output window, operand 0, single buffered']
    %9 = vsyncpa [#allocation3], 0
    %10 = vsyncpa [#allocation6], 0
    %11 = vsyncpa [#allocation4], 0
    // Predicated region
    $region2: #{tpu_custom_call.1} parent=1 // pred_check
      _
    $region3: #{tpu_custom_call.1} parent=1 // pred_check_branch
      %13 = sbr.rel (0) target = $region5
    $region4: #{tpu_custom_call.1} parent=1 // pred_region
      %s15 = ssub.s32 4096, 4096
      %16 = vsyncadd [#allocation3], %s15
      %s17 = sshll.u32 [#allocation2], 4
      %s18 = int_to_ptr.vmem [resolvable:$true] %s17
      %23 = dma.hbm_to_vmem [thread:$0]  %s0, 4096, %s18, [#allocation3], 128, 128, 8
    $region5: #{tpu_custom_call.1} parent=1 // pred_fallthru
      _
    // Predicated region
    $region6: #{tpu_custom_call.1} parent=1 // pred_check
      _
    $region7: #{tpu_custom_call.1} parent=1 // pred_check_branch
      %25 = sbr.rel (0) target = $region9
    $region8: #{tpu_custom_call.1} parent=1 // pred_region
      %s27 = ssub.s32 1024, 1024
      %28 = vsyncadd [#allocation6], %s27
      %s29 = sshll.u32 [#allocation5], 4
      %s30 = int_to_ptr.vmem [resolvable:$true] %s29
      %35 = dma.hbm_to_vmem [thread:$0]  %s1, 1024, %s30, [#allocation6], 64, 64, 4
    $region9: #{tpu_custom_call.1} parent=1 // pred_fallthru
      _
    // Predicated region
    $region10: #{tpu_custom_call.1} parent=1 // pred_check
      _
    $region11: #{tpu_custom_call.1} parent=1 // pred_check_branch
      %37 = sbr.rel (0) target = $region13
    $region12: #{tpu_custom_call.1} parent=1 // pred_region
      _
    $region13: #{tpu_custom_call.1} parent=1 // pred_fallthru
      _
    // Predicated region
    $region14: #{tpu_custom_call.1} parent=1 // pred_check
      _
    $region15: #{tpu_custom_call.1} parent=1 // pred_check_branch
      %39 = sbr.rel (0) target = $region17
    $region16: #{tpu_custom_call.1} parent=1 // pred_region
      _
    $region17: #{tpu_custom_call.1} parent=1 // pred_fallthru
      _
    // Predicated region
    $region18: #{tpu_custom_call.1} parent=1 // pred_check
      _
    $region19: #{tpu_custom_call.1} parent=1 // pred_check_branch
      %41 = sbr.rel (0) target = $region21
    $region20: #{tpu_custom_call.1} parent=1 // pred_region
      %42 = dma.done [#allocation3], 4096
    $region21: #{tpu_custom_call.1} parent=1 // pred_fallthru
      _
    // Predicated region
    $region22: #{tpu_custom_call.1} parent=1 // pred_check
      _
    $region23: #{tpu_custom_call.1} parent=1 // pred_check_branch
      %44 = sbr.rel (0) target = $region25
    $region24: #{tpu_custom_call.1} parent=1 // pred_region
      %45 = dma.done [#allocation6], 1024
    $region25: #{tpu_custom_call.1} parent=1 // pred_fallthru
      _
    %v47 = vld [vmem:[#allocation2] sm:$0xff]
    %v48 = vld [vmem:[#allocation2 + $0x8] sm:$0xff]
    %v49 = vld [vmem:[#allocation2 + $0x10] sm:$0xff]
    %v50 = vld [vmem:[#allocation2 + $0x18] sm:$0xff]
    %v51 = vld [vmem:[#allocation2 + $0x20] sm:$0xff]
    %v52 = vld [vmem:[#allocation2 + $0x28] sm:$0xff]
    %v53 = vld [vmem:[#allocation2 + $0x30] sm:$0xff]
    %v54 = vld [vmem:[#allocation2 + $0x38] sm:$0xff]
    %v55 = vld [vmem:[#allocation2 + $0x40] sm:$0xff]
    %v56 = vld [vmem:[#allocation2 + $0x48] sm:$0xff]
    %v57 = vld [vmem:[#allocation2 + $0x50] sm:$0xff]
    %v58 = vld [vmem:[#allocation2 + $0x58] sm:$0xff]
    %v59 = vld [vmem:[#allocation2 + $0x60] sm:$0xff]
    %v60 = vld [vmem:[#allocation2 + $0x68] sm:$0xff]
    %v61 = vld [vmem:[#allocation2 + $0x70] sm:$0xff]
    %v62 = vld [vmem:[#allocation2 + $0x78] sm:$0xff]
    %v63 = vld [vmem:[#allocation2 + $0x80] sm:$0xff]
    %v64 = vld [vmem:[#allocation2 + $0x88] sm:$0xff]
    %v65 = vld [vmem:[#allocation2 + $0x90] sm:$0xff]
    %v66 = vld [vmem:[#allocation2 + $0x98] sm:$0xff]
    %v67 = vld [vmem:[#allocation2 + $0xa0] sm:$0xff]
    %v68 = vld [vmem:[#allocation2 + $0xa8] sm:$0xff]
    %v69 = vld [vmem:[#allocation2 + $0xb0] sm:$0xff]
    %v70 = vld [vmem:[#allocation2 + $0xb8] sm:$0xff]
    %v71 = vld [vmem:[#allocation2 + $0xc0] sm:$0xff]
    %v72 = vld [vmem:[#allocation2 + $0xc8] sm:$0xff]
    %v73 = vld [vmem:[#allocation2 + $0xd0] sm:$0xff]
    %v74 = vld [vmem:[#allocation2 + $0xd8] sm:$0xff]
    %v75 = vld [vmem:[#allocation2 + $0xe0] sm:$0xff]
    %v76 = vld [vmem:[#allocation2 + $0xe8] sm:$0xff]
    %v77 = vld [vmem:[#allocation2 + $0xf0] sm:$0xff]
    %v78 = vld [vmem:[#allocation2 + $0xf8] sm:$0xff]
    %v79 = vld [vmem:[#allocation5] sm:$0xf]
    %v80 = vld [vmem:[#allocation5 + $0x4] sm:$0xf]
    %v81 = vld [vmem:[#allocation5 + $0x8] sm:$0xf]
    %v82 = vld [vmem:[#allocation5 + $0xc] sm:$0xf]
    %v83 = vld [vmem:[#allocation5 + $0x10] sm:$0xf]
    %v84 = vld [vmem:[#allocation5 + $0x14] sm:$0xf]
    %v85 = vld [vmem:[#allocation5 + $0x18] sm:$0xf]
    %v86 = vld [vmem:[#allocation5 + $0x1c] sm:$0xf]
    %v87 = vld [vmem:[#allocation5 + $0x20] sm:$0xf]
    %v88 = vld [vmem:[#allocation5 + $0x24] sm:$0xf]
    %v89 = vld [vmem:[#allocation5 + $0x28] sm:$0xf]
    %v90 = vld [vmem:[#allocation5 + $0x2c] sm:$0xf]
    %v91 = vld [vmem:[#allocation5 + $0x30] sm:$0xf]
    %v92 = vld [vmem:[#allocation5 + $0x34] sm:$0xf]
    %v93 = vld [vmem:[#allocation5 + $0x38] sm:$0xf]
    %v94 = vld [vmem:[#allocation5 + $0x3c] sm:$0xf]
    %v95 = vpack.c.bf16 %v48, %v47
    %v96 = vpack.c.bf16 %v50, %v49
    %v97 = vpack.c.bf16 %v52, %v51
    %v98 = vpack.c.bf16 %v54, %v53
    %v99 = vpack.c.bf16 %v56, %v55
    %v100 = vpack.c.bf16 %v58, %v57
    %v101 = vpack.c.bf16 %v60, %v59
    %v102 = vpack.c.bf16 %v62, %v61
    %v103 = vpack.c.bf16 %v64, %v63
    %v104 = vpack.c.bf16 %v66, %v65
    %v105 = vpack.c.bf16 %v68, %v67
    %v106 = vpack.c.bf16 %v70, %v69
    %v107 = vpack.c.bf16 %v72, %v71
    %v108 = vpack.c.bf16 %v74, %v73
    %v109 = vpack.c.bf16 %v76, %v75
    %v110 = vpack.c.bf16 %v78, %v77
    %v111 = vunpack.c.l.bf16 %v95
    %v112 = vunpack.c.h.bf16 %v95
    %v113 = vunpack.c.l.bf16 %v96
    %v114 = vunpack.c.h.bf16 %v96
    %v115 = vunpack.c.l.bf16 %v97
    %v116 = vunpack.c.h.bf16 %v97
    %v117 = vunpack.c.l.bf16 %v98
    %v118 = vunpack.c.h.bf16 %v98
    %v119 = vunpack.c.l.bf16 %v99
    %v120 = vunpack.c.h.bf16 %v99
    %v121 = vunpack.c.l.bf16 %v100
    %v122 = vunpack.c.h.bf16 %v100
    %v123 = vunpack.c.l.bf16 %v101
    %v124 = vunpack.c.h.bf16 %v101
    %v125 = vunpack.c.l.bf16 %v102
    %v126 = vunpack.c.h.bf16 %v102
    %v127 = vunpack.c.l.bf16 %v103
    %v128 = vunpack.c.h.bf16 %v103
    %v129 = vunpack.c.l.bf16 %v104
    %v130 = vunpack.c.h.bf16 %v104
    %v131 = vunpack.c.l.bf16 %v105
    %v132 = vunpack.c.h.bf16 %v105
    %v133 = vunpack.c.l.bf16 %v106
    %v134 = vunpack.c.h.bf16 %v106
    %v135 = vunpack.c.l.bf16 %v107
    %v136 = vunpack.c.h.bf16 %v107
    %v137 = vunpack.c.l.bf16 %v108
    %v138 = vunpack.c.h.bf16 %v108
    %v139 = vunpack.c.l.bf16 %v109
    %v140 = vunpack.c.h.bf16 %v109
    %v141 = vunpack.c.l.bf16 %v110
    %v142 = vunpack.c.h.bf16 %v110
    %v143 = vsub.f32 %v47, %v111
    %v144 = vsub.f32 %v48, %v112
    %v145 = vsub.f32 %v49, %v113
    %v146 = vsub.f32 %v50, %v114
    %v147 = vsub.f32 %v51, %v115
    %v148 = vsub.f32 %v52, %v116
    %v149 = vsub.f32 %v53, %v117
    %v150 = vsub.f32 %v54, %v118
    %v151 = vsub.f32 %v55, %v119
    %v152 = vsub.f32 %v56, %v120
    %v153 = vsub.f32 %v57, %v121
    %v154 = vsub.f32 %v58, %v122
    %v155 = vsub.f32 %v59, %v123
    %v156 = vsub.f32 %v60, %v124
    %v157 = vsub.f32 %v61, %v125
    %v158 = vsub.f32 %v62, %v126
    %v159 = vsub.f32 %v63, %v127
    %v160 = vsub.f32 %v64, %v128
    %v161 = vsub.f32 %v65, %v129
    %v162 = vsub.f32 %v66, %v130
    %v163 = vsub.f32 %v67, %v131
    %v164 = vsub.f32 %v68, %v132
    %v165 = vsub.f32 %v69, %v133
    %v166 = vsub.f32 %v70, %v134
    %v167 = vsub.f32 %v71, %v135
    %v168 = vsub.f32 %v72, %v136
    %v169 = vsub.f32 %v73, %v137
    %v170 = vsub.f32 %v74, %v138
    %v171 = vsub.f32 %v75, %v139
    %v172 = vsub.f32 %v76, %v140
    %v173 = vsub.f32 %v77, %v141
    %v174 = vsub.f32 %v78, %v142
    %v175 = vpack.c.bf16 %v144, %v143
    %v176 = vpack.c.bf16 %v146, %v145
    %v177 = vpack.c.bf16 %v148, %v147
    %v178 = vpack.c.bf16 %v150, %v149
    %v179 = vpack.c.bf16 %v152, %v151
    %v180 = vpack.c.bf16 %v154, %v153
    %v181 = vpack.c.bf16 %v156, %v155
    %v182 = vpack.c.bf16 %v158, %v157
    %v183 = vpack.c.bf16 %v160, %v159
    %v184 = vpack.c.bf16 %v162, %v161
    %v185 = vpack.c.bf16 %v164, %v163
    %v186 = vpack.c.bf16 %v166, %v165
    %v187 = vpack.c.bf16 %v168, %v167
    %v188 = vpack.c.bf16 %v170, %v169
    %v189 = vpack.c.bf16 %v172, %v171
    %v190 = vpack.c.bf16 %v174, %v173
    %v207 = vunpack.c.l.b16 %v79
    %v208 = vunpack.c.l.b16 %v80
    %v209 = vunpack.c.l.b16 %v81
    %v210 = vunpack.c.l.b16 %v82
    %v211 = vunpack.c.l.b16 %v83
    %v212 = vunpack.c.l.b16 %v84
    %v213 = vunpack.c.l.b16 %v85
    %v214 = vunpack.c.l.b16 %v86
    %v215 = vunpack.c.l.b16 %v87
    %v216 = vunpack.c.l.b16 %v88
    %v217 = vunpack.c.l.b16 %v89
    %v218 = vunpack.c.l.b16 %v90
    %v219 = vunpack.c.l.b16 %v91
    %v220 = vunpack.c.l.b16 %v92
    %v221 = vunpack.c.l.b16 %v93
    %v222 = vunpack.c.l.b16 %v94
    %v223 = vpack.c.b16 %v208, %v207
    %v224 = vpack.c.b16 %v210, %v209
    %v225 = vpack.c.b16 %v212, %v211
    %v226 = vpack.c.b16 %v214, %v213
    %v227 = vpack.c.b16 %v216, %v215
    %v228 = vpack.c.b16 %v218, %v217
    %v229 = vpack.c.b16 %v220, %v219
    %v230 = vpack.c.b16 %v222, %v221
    %239 = vmatprep.subr.bf16.mxu0 0
    %240 = vmatpush1.bf16.msra.mxu0 %v223
    %241 = vmatprep.subr.bf16.mxu0 0
    %242 = vmatpush1.bf16.msra.mxu0 %v224
    %243 = vmatprep.subr.bf16.mxu0 0
    %244 = vmatpush1.bf16.msra.mxu0 %v225
    %245 = vmatprep.subr.bf16.mxu0 0
    %246 = vmatpush1.bf16.msra.mxu0 %v226
    %247 = vmatprep.subr.bf16.mxu0 0
    %248 = vmatpush1.bf16.msra.mxu0 %v227
    %249 = vmatprep.subr.bf16.mxu0 0
    %250 = vmatpush1.bf16.msra.mxu0 %v228
    %251 = vmatprep.subr.bf16.mxu0 0
    %252 = vmatpush1.bf16.msra.mxu0 %v229
    %253 = vmatprep.subr.bf16.mxu0 0
    %254 = vmatpush1.bf16.msra.mxu0 %v230
    %255 = vmatprep.subr.bf16.mxu0 0
    %256 = vmatpush1.bf16.msra.mxu0 0
    %257 = vmatprep.subr.bf16.mxu0 0
    %258 = vmatpush1.bf16.msra.mxu0 0
    %259 = vmatprep.subr.bf16.mxu0 0
    %260 = vmatpush1.bf16.msra.mxu0 0
    %261 = vmatprep.subr.bf16.mxu0 0
    %262 = vmatpush1.bf16.msra.mxu0 0
    %263 = vmatprep.subr.bf16.mxu0 0
    %264 = vmatpush1.bf16.msra.mxu0 0
    %265 = vmatprep.subr.bf16.mxu0 0
    %266 = vmatpush1.bf16.msra.mxu0 0
    %267 = vmatprep.subr.bf16.mxu0 0
    %268 = vmatpush1.bf16.msra.mxu0 0
    %269 = vmatprep.subr.bf16.mxu0 0
    %270 = vmatpush1.bf16.msra.mxu0 0
    %271 = vmatprep.mubr.bf16.mxu0 0
    %272 = vmatmul.mubr.bf16.gmra.mrb[0].mxu0 %v175
    %v273 = vpop.f32.mrb[0].mxu0
    %v274 = vadd.f32 0.0, %v273
    %v275 = vpop.f32.mrb[0].mxu0
    %v276 = vpop.f32.mrb[0].mxu0
    %v277 = vadd.f32 0.0, %v276
    %v278 = vpop.f32.mrb[0].mxu0
    %279 = vmatprep.mubr.bf16.mxu0 0
    %280 = vmatmul.mubr.bf16.gmra.mrb[0].mxu0 %v176
    %v281 = vpop.f32.mrb[0].mxu0
    %v282 = vadd.f32 0.0, %v281
    %v283 = vpop.f32.mrb[0].mxu0
    %v284 = vpop.f32.mrb[0].mxu0
    %v285 = vadd.f32 0.0, %v284
    %v286 = vpop.f32.mrb[0].mxu0
    %287 = vmatprep.mubr.bf16.mxu0 0
    %288 = vmatmul.mubr.bf16.gmra.mrb[0].mxu0 %v177
    %v289 = vpop.f32.mrb[0].mxu0
    %v290 = vadd.f32 0.0, %v289
    %v291 = vpop.f32.mrb[0].mxu0
    %v292 = vpop.f32.mrb[0].mxu0
    %v293 = vadd.f32 0.0, %v292
    %v294 = vpop.f32.mrb[0].mxu0
    %295 = vmatprep.mubr.bf16.mxu0 0
    %296 = vmatmul.mubr.bf16.gmra.mrb[0].mxu0 %v178
    %v297 = vpop.f32.mrb[0].mxu0
    %v298 = vadd.f32 0.0, %v297
    %v299 = vpop.f32.mrb[0].mxu0
    %v300 = vpop.f32.mrb[0].mxu0
    %v301 = vadd.f32 0.0, %v300
    %v302 = vpop.f32.mrb[0].mxu0
    %303 = vmatprep.mubr.bf16.mxu0 0
    %304 = vmatmul.mubr.bf16.gmra.mrb[0].mxu0 %v179
    %v305 = vpop.f32.mrb[0].mxu0
    %v306 = vadd.f32 0.0, %v305
    %v307 = vpop.f32.mrb[0].mxu0
    %v308 = vpop.f32.mrb[0].mxu0
    %v309 = vadd.f32 0.0, %v308
    %v310 = vpop.f32.mrb[0].mxu0
    %311 = vmatprep.mubr.bf16.mxu0 0
    %312 = vmatmul.mubr.bf16.gmra.mrb[0].mxu0 %v180
    %v313 = vpop.f32.mrb[0].mxu0
    %v314 = vadd.f32 0.0, %v313
    %v315 = vpop.f32.mrb[0].mxu0
    %v316 = vpop.f32.mrb[0].mxu0
    %v317 = vadd.f32 0.0, %v316
    %v318 = vpop.f32.mrb[0].mxu0
    %319 = vmatprep.mubr.bf16.mxu0 0
    %320 = vmatmul.mubr.bf16.gmra.mrb[0].mxu0 %v181
    %v321 = vpop.f32.mrb[0].mxu0
    %v322 = vadd.f32 0.0, %v321
    %v323 = vpop.f32.mrb[0].mxu0
    %v324 = vpop.f32.mrb[0].mxu0
    %v325 = vadd.f32 0.0, %v324
    %v326 = vpop.f32.mrb[0].mxu0
    %327 = vmatprep.mubr.bf16.mxu0 0
    %328 = vmatmul.mubr.bf16.gmra.mrb[0].mxu0 %v182
    %v329 = vpop.f32.mrb[0].mxu0
    %v330 = vadd.f32 0.0, %v329
    %v331 = vpop.f32.mrb[0].mxu0
    %v332 = vpop.f32.mrb[0].mxu0
    %v333 = vadd.f32 0.0, %v332
    %v334 = vpop.f32.mrb[0].mxu0
    %335 = vmatprep.mubr.bf16.mxu0 0
    %336 = vmatmul.mubr.bf16.gmra.mrb[0].mxu0 %v183
    %v337 = vpop.f32.mrb[0].mxu0
    %v338 = vadd.f32 0.0, %v337
    %v339 = vpop.f32.mrb[0].mxu0
    %v340 = vpop.f32.mrb[0].mxu0
    %v341 = vadd.f32 0.0, %v340
    %v342 = vpop.f32.mrb[0].mxu0
    %343 = vmatprep.mubr.bf16.mxu0 0
    %344 = vmatmul.mubr.bf16.gmra.mrb[0].mxu0 %v184
    %v345 = vpop.f32.mrb[0].mxu0
    %v346 = vadd.f32 0.0, %v345
    %v347 = vpop.f32.mrb[0].mxu0
    %v348 = vpop.f32.mrb[0].mxu0
    %v349 = vadd.f32 0.0, %v348
    %v350 = vpop.f32.mrb[0].mxu0
    %351 = vmatprep.mubr.bf16.mxu0 0
    %352 = vmatmul.mubr.bf16.gmra.mrb[0].mxu0 %v185
    %v353 = vpop.f32.mrb[0].mxu0
    %v354 = vadd.f32 0.0, %v353
    %v355 = vpop.f32.mrb[0].mxu0
    %v356 = vpop.f32.mrb[0].mxu0
    %v357 = vadd.f32 0.0, %v356
    %v358 = vpop.f32.mrb[0].mxu0
    %359 = vmatprep.mubr.bf16.mxu0 0
    %360 = vmatmul.mubr.bf16.gmra.mrb[0].mxu0 %v186
    %v361 = vpop.f32.mrb[0].mxu0
    %v362 = vadd.f32 0.0, %v361
    %v363 = vpop.f32.mrb[0].mxu0
    %v364 = vpop.f32.mrb[0].mxu0
    %v365 = vadd.f32 0.0, %v364
    %v366 = vpop.f32.mrb[0].mxu0
    %367 = vmatprep.mubr.bf16.mxu0 0
    %368 = vmatmul.mubr.bf16.gmra.mrb[0].mxu0 %v187
    %v369 = vpop.f32.mrb[0].mxu0
    %v370 = vadd.f32 0.0, %v369
    %v371 = vpop.f32.mrb[0].mxu0
    %v372 = vpop.f32.mrb[0].mxu0
    %v373 = vadd.f32 0.0, %v372
    %v374 = vpop.f32.mrb[0].mxu0
    %375 = vmatprep.mubr.bf16.mxu0 0
    %376 = vmatmul.mubr.bf16.gmra.mrb[0].mxu0 %v188
    %v377 = vpop.f32.mrb[0].mxu0
    %v378 = vadd.f32 0.0, %v377
    %v379 = vpop.f32.mrb[0].mxu0
    %v380 = vpop.f32.mrb[0].mxu0
    %v381 = vadd.f32 0.0, %v380
    %v382 = vpop.f32.mrb[0].mxu0
    %383 = vmatprep.mubr.bf16.mxu0 0
    %384 = vmatmul.mubr.bf16.gmra.mrb[0].mxu0 %v189
    %v385 = vpop.f32.mrb[0].mxu0
    %v386 = vadd.f32 0.0, %v385
    %v387 = vpop.f32.mrb[0].mxu0
    %v388 = vpop.f32.mrb[0].mxu0
    %v389 = vadd.f32 0.0, %v388
    %v390 = vpop.f32.mrb[0].mxu0
    %391 = vmatprep.mubr.bf16.mxu0 0
    %392 = vmatmul.mubr.bf16.gmra.mrb[0].mxu0 %v190
    %v393 = vpop.f32.mrb[0].mxu0
    %v394 = vadd.f32 0.0, %v393
    %v395 = vpop.f32.mrb[0].mxu0
    %v396 = vpop.f32.mrb[0].mxu0
    %v397 = vadd.f32 0.0, %v396
    %v398 = vpop.f32.mrb[0].mxu0
    %399 = vdwg.mxu0
    %400 = vmatprep.subr.bf16.mxu0 0
    %401 = vmatpush1.bf16.msra.mxu0 %v223
    %402 = vmatprep.subr.bf16.mxu0 0
    %403 = vmatpush1.bf16.msra.mxu0 %v224
    %404 = vmatprep.subr.bf16.mxu0 0
    %405 = vmatpush1.bf16.msra.mxu0 %v225
    %406 = vmatprep.subr.bf16.mxu0 0
    %407 = vmatpush1.bf16.msra.mxu0 %v226
    %408 = vmatprep.subr.bf16.mxu0 0
    %409 = vmatpush1.bf16.msra.mxu0 %v227
    %410 = vmatprep.subr.bf16.mxu0 0
    %411 = vmatpush1.bf16.msra.mxu0 %v228
    %412 = vmatprep.subr.bf16.mxu0 0
    %413 = vmatpush1.bf16.msra.mxu0 %v229
    %414 = vmatprep.subr.bf16.mxu0 0
    %415 = vmatpush1.bf16.msra.mxu0 %v230
    %416 = vmatprep.subr.bf16.mxu0 0
    %417 = vmatpush1.bf16.msra.mxu0 0
    %418 = vmatprep.subr.bf16.mxu0 0
    %419 = vmatpush1.bf16.msra.mxu0 0
    %420 = vmatprep.subr.bf16.mxu0 0
    %421 = vmatpush1.bf16.msra.mxu0 0
    %422 = vmatprep.subr.bf16.mxu0 0
    %423 = vmatpush1.bf16.msra.mxu0 0
    %424 = vmatprep.subr.bf16.mxu0 0
    %425 = vmatpush1.bf16.msra.mxu0 0
    %426 = vmatprep.subr.bf16.mxu0 0
    %427 = vmatpush1.bf16.msra.mxu0 0
    %428 = vmatprep.subr.bf16.mxu0 0
    %429 = vmatpush1.bf16.msra.mxu0 0
    %430 = vmatprep.subr.bf16.mxu0 0
    %431 = vmatpush1.bf16.msra.mxu0 0
    %432 = vmatprep.mubr.bf16.mxu0 0
    %433 = vmatmul.mubr.bf16.gmra.mrb[0].mxu0 %v95
    %v434 = vpop.f32.mrb[0].mxu0
    %v435 = vadd.f32 %v274, %v434
    %v436 = vpop.f32.mrb[0].mxu0
    %v437 = vpop.f32.mrb[0].mxu0
    %v438 = vadd.f32 %v277, %v437
    %v439 = vpop.f32.mrb[0].mxu0
    %440 = vmatprep.mubr.bf16.mxu0 0
    %441 = vmatmul.mubr.bf16.gmra.mrb[0].mxu0 %v96
    %v442 = vpop.f32.mrb[0].mxu0
    %v443 = vadd.f32 %v282, %v442
    %v444 = vpop.f32.mrb[0].mxu0
    %v445 = vpop.f32.mrb[0].mxu0
    %v446 = vadd.f32 %v285, %v445
    %v447 = vpop.f32.mrb[0].mxu0
    %448 = vmatprep.mubr.bf16.mxu0 0
    %449 = vmatmul.mubr.bf16.gmra.mrb[0].mxu0 %v97
    %v450 = vpop.f32.mrb[0].mxu0
    %v451 = vadd.f32 %v290, %v450
    %v452 = vpop.f32.mrb[0].mxu0
    %v453 = vpop.f32.mrb[0].mxu0
    %v454 = vadd.f32 %v293, %v453
    %v455 = vpop.f32.mrb[0].mxu0
    %456 = vmatprep.mubr.bf16.mxu0 0
    %457 = vmatmul.mubr.bf16.gmra.mrb[0].mxu0 %v98
    %v458 = vpop.f32.mrb[0].mxu0
    %v459 = vadd.f32 %v298, %v458
    %v460 = vpop.f32.mrb[0].mxu0
    %v461 = vpop.f32.mrb[0].mxu0
    %v462 = vadd.f32 %v301, %v461
    %v463 = vpop.f32.mrb[0].mxu0
    %464 = vmatprep.mubr.bf16.mxu0 0
    %465 = vmatmul.mubr.bf16.gmra.mrb[0].mxu0 %v99
    %v466 = vpop.f32.mrb[0].mxu0
    %v467 = vadd.f32 %v306, %v466
    %v468 = vpop.f32.mrb[0].mxu0
    %v469 = vpop.f32.mrb[0].mxu0
    %v470 = vadd.f32 %v309, %v469
    %v471 = vpop.f32.mrb[0].mxu0
    %472 = vmatprep.mubr.bf16.mxu0 0
    %473 = vmatmul.mubr.bf16.gmra.mrb[0].mxu0 %v100
    %v474 = vpop.f32.mrb[0].mxu0
    %v475 = vadd.f32 %v314, %v474
    %v476 = vpop.f32.mrb[0].mxu0
    %v477 = vpop.f32.mrb[0].mxu0
    %v478 = vadd.f32 %v317, %v477
    %v479 = vpop.f32.mrb[0].mxu0
    %480 = vmatprep.mubr.bf16.mxu0 0
    %481 = vmatmul.mubr.bf16.gmra.mrb[0].mxu0 %v101
    %v482 = vpop.f32.mrb[0].mxu0
    %v483 = vadd.f32 %v322, %v482
    %v484 = vpop.f32.mrb[0].mxu0
    %v485 = vpop.f32.mrb[0].mxu0
    %v486 = vadd.f32 %v325, %v485
    %v487 = vpop.f32.mrb[0].mxu0
    %488 = vmatprep.mubr.bf16.mxu0 0
    %489 = vmatmul.mubr.bf16.gmra.mrb[0].mxu0 %v102
    %v490 = vpop.f32.mrb[0].mxu0
    %v491 = vadd.f32 %v330, %v490
    %v492 = vpop.f32.mrb[0].mxu0
    %v493 = vpop.f32.mrb[0].mxu0
    %v494 = vadd.f32 %v333, %v493
    %v495 = vpop.f32.mrb[0].mxu0
    %496 = vmatprep.mubr.bf16.mxu0 0
    %497 = vmatmul.mubr.bf16.gmra.mrb[0].mxu0 %v103
    %v498 = vpop.f32.mrb[0].mxu0
    %v499 = vadd.f32 %v338, %v498
    %v500 = vpop.f32.mrb[0].mxu0
    %v501 = vpop.f32.mrb[0].mxu0
    %v502 = vadd.f32 %v341, %v501
    %v503 = vpop.f32.mrb[0].mxu0
    %504 = vmatprep.mubr.bf16.mxu0 0
    %505 = vmatmul.mubr.bf16.gmra.mrb[0].mxu0 %v104
    %v506 = vpop.f32.mrb[0].mxu0
    %v507 = vadd.f32 %v346, %v506
    %v508 = vpop.f32.mrb[0].mxu0
    %v509 = vpop.f32.mrb[0].mxu0
    %v510 = vadd.f32 %v349, %v509
    %v511 = vpop.f32.mrb[0].mxu0
    %512 = vmatprep.mubr.bf16.mxu0 0
    %513 = vmatmul.mubr.bf16.gmra.mrb[0].mxu0 %v105
    %v514 = vpop.f32.mrb[0].mxu0
    %v515 = vadd.f32 %v354, %v514
    %v516 = vpop.f32.mrb[0].mxu0
    %v517 = vpop.f32.mrb[0].mxu0
    %v518 = vadd.f32 %v357, %v517
    %v519 = vpop.f32.mrb[0].mxu0
    %520 = vmatprep.mubr.bf16.mxu0 0
    %521 = vmatmul.mubr.bf16.gmra.mrb[0].mxu0 %v106
    %v522 = vpop.f32.mrb[0].mxu0
    %v523 = vadd.f32 %v362, %v522
    %v524 = vpop.f32.mrb[0].mxu0
    %v525 = vpop.f32.mrb[0].mxu0
    %v526 = vadd.f32 %v365, %v525
    %v527 = vpop.f32.mrb[0].mxu0
    %528 = vmatprep.mubr.bf16.mxu0 0
    %529 = vmatmul.mubr.bf16.gmra.mrb[0].mxu0 %v107
    %v530 = vpop.f32.mrb[0].mxu0
    %v531 = vadd.f32 %v370, %v530
    %v532 = vpop.f32.mrb[0].mxu0
    %v533 = vpop.f32.mrb[0].mxu0
    %v534 = vadd.f32 %v373, %v533
    %v535 = vpop.f32.mrb[0].mxu0
    %536 = vmatprep.mubr.bf16.mxu0 0
    %537 = vmatmul.mubr.bf16.gmra.mrb[0].mxu0 %v108
    %v538 = vpop.f32.mrb[0].mxu0
    %v539 = vadd.f32 %v378, %v538
    %v540 = vpop.f32.mrb[0].mxu0
    %v541 = vpop.f32.mrb[0].mxu0
    %v542 = vadd.f32 %v381, %v541
    %v543 = vpop.f32.mrb[0].mxu0
    %544 = vmatprep.mubr.bf16.mxu0 0
    %545 = vmatmul.mubr.bf16.gmra.mrb[0].mxu0 %v109
    %v546 = vpop.f32.mrb[0].mxu0
    %v547 = vadd.f32 %v386, %v546
    %v548 = vpop.f32.mrb[0].mxu0
    %v549 = vpop.f32.mrb[0].mxu0
    %v550 = vadd.f32 %v389, %v549
    %v551 = vpop.f32.mrb[0].mxu0
    %552 = vmatprep.mubr.bf16.mxu0 0
    %553 = vmatmul.mubr.bf16.gmra.mrb[0].mxu0 %v110
    %v554 = vpop.f32.mrb[0].mxu0
    %v555 = vadd.f32 %v394, %v554
    %v556 = vpop.f32.mrb[0].mxu0
    %v557 = vpop.f32.mrb[0].mxu0
    %v558 = vadd.f32 %v397, %v557
    %v559 = vpop.f32.mrb[0].mxu0
    %560 = vdwg.mxu0
    %v561 = vunpack.c.l.bf16 %v175
    %v562 = vunpack.c.h.bf16 %v175
    %v563 = vunpack.c.l.bf16 %v176
    %v564 = vunpack.c.h.bf16 %v176
    %v565 = vunpack.c.l.bf16 %v177
    %v566 = vunpack.c.h.bf16 %v177
    %v567 = vunpack.c.l.bf16 %v178
    %v568 = vunpack.c.h.bf16 %v178
    %v569 = vunpack.c.l.bf16 %v179
    %v570 = vunpack.c.h.bf16 %v179
    %v571 = vunpack.c.l.bf16 %v180
    %v572 = vunpack.c.h.bf16 %v180
    %v573 = vunpack.c.l.bf16 %v181
    %v574 = vunpack.c.h.bf16 %v181
    %v575 = vunpack.c.l.bf16 %v182
    %v576 = vunpack.c.h.bf16 %v182
    %v577 = vunpack.c.l.bf16 %v183
    %v578 = vunpack.c.h.bf16 %v183
    %v579 = vunpack.c.l.bf16 %v184
    %v580 = vunpack.c.h.bf16 %v184
    %v581 = vunpack.c.l.bf16 %v185
    %v582 = vunpack.c.h.bf16 %v185
    %v583 = vunpack.c.l.bf16 %v186
    %v584 = vunpack.c.h.bf16 %v186
    %v585 = vunpack.c.l.bf16 %v187
    %v586 = vunpack.c.h.bf16 %v187
    %v587 = vunpack.c.l.bf16 %v188
    %v588 = vunpack.c.h.bf16 %v188
    %v589 = vunpack.c.l.bf16 %v189
    %v590 = vunpack.c.h.bf16 %v189
    %v591 = vunpack.c.l.bf16 %v190
    %v592 = vunpack.c.h.bf16 %v190
    %v593 = vsub.f32 %v143, %v561
    %v594 = vsub.f32 %v144, %v562
    %v595 = vsub.f32 %v145, %v563
    %v596 = vsub.f32 %v146, %v564
    %v597 = vsub.f32 %v147, %v565
    %v598 = vsub.f32 %v148, %v566
    %v599 = vsub.f32 %v149, %v567
    %v600 = vsub.f32 %v150, %v568
    %v601 = vsub.f32 %v151, %v569
    %v602 = vsub.f32 %v152, %v570
    %v603 = vsub.f32 %v153, %v571
    %v604 = vsub.f32 %v154, %v572
    %v605 = vsub.f32 %v155, %v573
    %v606 = vsub.f32 %v156, %v574
    %v607 = vsub.f32 %v157, %v575
    %v608 = vsub.f32 %v158, %v576
    %v609 = vsub.f32 %v159, %v577
    %v610 = vsub.f32 %v160, %v578
    %v611 = vsub.f32 %v161, %v579
    %v612 = vsub.f32 %v162, %v580
    %v613 = vsub.f32 %v163, %v581
    %v614 = vsub.f32 %v164, %v582
    %v615 = vsub.f32 %v165, %v583
    %v616 = vsub.f32 %v166, %v584
    %v617 = vsub.f32 %v167, %v585
    %v618 = vsub.f32 %v168, %v586
    %v619 = vsub.f32 %v169, %v587
    %v620 = vsub.f32 %v170, %v588
    %v621 = vsub.f32 %v171, %v589
    %v622 = vsub.f32 %v172, %v590
    %v623 = vsub.f32 %v173, %v591
    %v624 = vsub.f32 %v174, %v592
    %v625 = vpack.c.bf16 %v594, %v593
    %v626 = vpack.c.bf16 %v596, %v595
    %v627 = vpack.c.bf16 %v598, %v597
    %v628 = vpack.c.bf16 %v600, %v599
    %v629 = vpack.c.bf16 %v602, %v601
    %v630 = vpack.c.bf16 %v604, %v603
    %v631 = vpack.c.bf16 %v606, %v605
    %v632 = vpack.c.bf16 %v608, %v607
    %v633 = vpack.c.bf16 %v610, %v609
    %v634 = vpack.c.bf16 %v612, %v611
    %v635 = vpack.c.bf16 %v614, %v613
    %v636 = vpack.c.bf16 %v616, %v615
    %v637 = vpack.c.bf16 %v618, %v617
    %v638 = vpack.c.bf16 %v620, %v619
    %v639 = vpack.c.bf16 %v622, %v621
    %v640 = vpack.c.bf16 %v624, %v623
    %641 = vmatprep.subr.bf16.mxu0 0
    %642 = vmatpush1.bf16.msra.mxu0 %v223
    %643 = vmatprep.subr.bf16.mxu0 0
    %644 = vmatpush1.bf16.msra.mxu0 %v224
    %645 = vmatprep.subr.bf16.mxu0 0
    %646 = vmatpush1.bf16.msra.mxu0 %v225
    %647 = vmatprep.subr.bf16.mxu0 0
    %648 = vmatpush1.bf16.msra.mxu0 %v226
    %649 = vmatprep.subr.bf16.mxu0 0
    %650 = vmatpush1.bf16.msra.mxu0 %v227
    %651 = vmatprep.subr.bf16.mxu0 0
    %652 = vmatpush1.bf16.msra.mxu0 %v228
    %653 = vmatprep.subr.bf16.mxu0 0
    %654 = vmatpush1.bf16.msra.mxu0 %v229
    %655 = vmatprep.subr.bf16.mxu0 0
    %656 = vmatpush1.bf16.msra.mxu0 %v230
    %657 = vmatprep.subr.bf16.mxu0 0
    %658 = vmatpush1.bf16.msra.mxu0 0
    %659 = vmatprep.subr.bf16.mxu0 0
    %660 = vmatpush1.bf16.msra.mxu0 0
    %661 = vmatprep.subr.bf16.mxu0 0
    %662 = vmatpush1.bf16.msra.mxu0 0
    %663 = vmatprep.subr.bf16.mxu0 0
    %664 = vmatpush1.bf16.msra.mxu0 0
    %665 = vmatprep.subr.bf16.mxu0 0
    %666 = vmatpush1.bf16.msra.mxu0 0
    %667 = vmatprep.subr.bf16.mxu0 0
    %668 = vmatpush1.bf16.msra.mxu0 0
    %669 = vmatprep.subr.bf16.mxu0 0
    %670 = vmatpush1.bf16.msra.mxu0 0
    %671 = vmatprep.subr.bf16.mxu0 0
    %672 = vmatpush1.bf16.msra.mxu0 0
    %673 = vmatprep.mubr.bf16.mxu0 0
    %674 = vmatmul.mubr.bf16.gmra.mrb[0].mxu0 %v625
    %v675 = vpop.f32.mrb[0].mxu0
    %v676 = vadd.f32 0.0, %v675
    %v677 = vpop.f32.mrb[0].mxu0
    %v678 = vpop.f32.mrb[0].mxu0
    %v679 = vadd.f32 0.0, %v678
    %v680 = vpop.f32.mrb[0].mxu0
    %681 = vmatprep.mubr.bf16.mxu0 0
    %682 = vmatmul.mubr.bf16.gmra.mrb[0].mxu0 %v626
    %v683 = vpop.f32.mrb[0].mxu0
    %v684 = vadd.f32 0.0, %v683
    %v685 = vpop.f32.mrb[0].mxu0
    %v686 = vpop.f32.mrb[0].mxu0
    %v687 = vadd.f32 0.0, %v686
    %v688 = vpop.f32.mrb[0].mxu0
    %689 = vmatprep.mubr.bf16.mxu0 0
    %690 = vmatmul.mubr.bf16.gmra.mrb[0].mxu0 %v627
    %v691 = vpop.f32.mrb[0].mxu0
    %v692 = vadd.f32 0.0, %v691
    %v693 = vpop.f32.mrb[0].mxu0
    %v694 = vpop.f32.mrb[0].mxu0
    %v695 = vadd.f32 0.0, %v694
    %v696 = vpop.f32.mrb[0].mxu0
    %697 = vmatprep.mubr.bf16.mxu0 0
    %698 = vmatmul.mubr.bf16.gmra.mrb[0].mxu0 %v628
    %v699 = vpop.f32.mrb[0].mxu0
    %v700 = vadd.f32 0.0, %v699
    %v701 = vpop.f32.mrb[0].mxu0
    %v702 = vpop.f32.mrb[0].mxu0
    %v703 = vadd.f32 0.0, %v702
    %v704 = vpop.f32.mrb[0].mxu0
    %705 = vmatprep.mubr.bf16.mxu0 0
    %706 = vmatmul.mubr.bf16.gmra.mrb[0].mxu0 %v629
    %v707 = vpop.f32.mrb[0].mxu0
    %v708 = vadd.f32 0.0, %v707
    %v709 = vpop.f32.mrb[0].mxu0
    %v710 = vpop.f32.mrb[0].mxu0
    %v711 = vadd.f32 0.0, %v710
    %v712 = vpop.f32.mrb[0].mxu0
    %713 = vmatprep.mubr.bf16.mxu0 0
    %714 = vmatmul.mubr.bf16.gmra.mrb[0].mxu0 %v630
    %v715 = vpop.f32.mrb[0].mxu0
    %v716 = vadd.f32 0.0, %v715
    %v717 = vpop.f32.mrb[0].mxu0
    %v718 = vpop.f32.mrb[0].mxu0
    %v719 = vadd.f32 0.0, %v718
    %v720 = vpop.f32.mrb[0].mxu0
    %721 = vmatprep.mubr.bf16.mxu0 0
    %722 = vmatmul.mubr.bf16.gmra.mrb[0].mxu0 %v631
    %v723 = vpop.f32.mrb[0].mxu0
    %v724 = vadd.f32 0.0, %v723
    %v725 = vpop.f32.mrb[0].mxu0
    %v726 = vpop.f32.mrb[0].mxu0
    %v727 = vadd.f32 0.0, %v726
    %v728 = vpop.f32.mrb[0].mxu0
    %729 = vmatprep.mubr.bf16.mxu0 0
    %730 = vmatmul.mubr.bf16.gmra.mrb[0].mxu0 %v632
    %v731 = vpop.f32.mrb[0].mxu0
    %v732 = vadd.f32 0.0, %v731
    %v733 = vpop.f32.mrb[0].mxu0
    %v734 = vpop.f32.mrb[0].mxu0
    %v735 = vadd.f32 0.0, %v734
    %v736 = vpop.f32.mrb[0].mxu0
    %737 = vmatprep.mubr.bf16.mxu0 0
    %738 = vmatmul.mubr.bf16.gmra.mrb[0].mxu0 %v633
    %v739 = vpop.f32.mrb[0].mxu0
    %v740 = vadd.f32 0.0, %v739
    %v741 = vpop.f32.mrb[0].mxu0
    %v742 = vpop.f32.mrb[0].mxu0
    %v743 = vadd.f32 0.0, %v742
    %v744 = vpop.f32.mrb[0].mxu0
    %745 = vmatprep.mubr.bf16.mxu0 0
    %746 = vmatmul.mubr.bf16.gmra.mrb[0].mxu0 %v634
    %v747 = vpop.f32.mrb[0].mxu0
    %v748 = vadd.f32 0.0, %v747
    %v749 = vpop.f32.mrb[0].mxu0
    %v750 = vpop.f32.mrb[0].mxu0
    %v751 = vadd.f32 0.0, %v750
    %v752 = vpop.f32.mrb[0].mxu0
    %753 = vmatprep.mubr.bf16.mxu0 0
    %754 = vmatmul.mubr.bf16.gmra.mrb[0].mxu0 %v635
    %v755 = vpop.f32.mrb[0].mxu0
    %v756 = vadd.f32 0.0, %v755
    %v757 = vpop.f32.mrb[0].mxu0
    %v758 = vpop.f32.mrb[0].mxu0
    %v759 = vadd.f32 0.0, %v758
    %v760 = vpop.f32.mrb[0].mxu0
    %761 = vmatprep.mubr.bf16.mxu0 0
    %762 = vmatmul.mubr.bf16.gmra.mrb[0].mxu0 %v636
    %v763 = vpop.f32.mrb[0].mxu0
    %v764 = vadd.f32 0.0, %v763
    %v765 = vpop.f32.mrb[0].mxu0
    %v766 = vpop.f32.mrb[0].mxu0
    %v767 = vadd.f32 0.0, %v766
    %v768 = vpop.f32.mrb[0].mxu0
    %769 = vmatprep.mubr.bf16.mxu0 0
    %770 = vmatmul.mubr.bf16.gmra.mrb[0].mxu0 %v637
    %v771 = vpop.f32.mrb[0].mxu0
    %v772 = vadd.f32 0.0, %v771
    %v773 = vpop.f32.mrb[0].mxu0
    %v774 = vpop.f32.mrb[0].mxu0
    %v775 = vadd.f32 0.0, %v774
    %v776 = vpop.f32.mrb[0].mxu0
    %777 = vmatprep.mubr.bf16.mxu0 0
    %778 = vmatmul.mubr.bf16.gmra.mrb[0].mxu0 %v638
    %v779 = vpop.f32.mrb[0].mxu0
    %v780 = vadd.f32 0.0, %v779
    %v781 = vpop.f32.mrb[0].mxu0
    %v782 = vpop.f32.mrb[0].mxu0
    %v783 = vadd.f32 0.0, %v782
    %v784 = vpop.f32.mrb[0].mxu0
    %785 = vmatprep.mubr.bf16.mxu0 0
    %786 = vmatmul.mubr.bf16.gmra.mrb[0].mxu0 %v639
    %v787 = vpop.f32.mrb[0].mxu0
    %v788 = vadd.f32 0.0, %v787
    %v789 = vpop.f32.mrb[0].mxu0
    %v790 = vpop.f32.mrb[0].mxu0
    %v791 = vadd.f32 0.0, %v790
    %v792 = vpop.f32.mrb[0].mxu0
    %793 = vmatprep.mubr.bf16.mxu0 0
    %794 = vmatmul.mubr.bf16.gmra.mrb[0].mxu0 %v640
    %v795 = vpop.f32.mrb[0].mxu0
    %v796 = vadd.f32 0.0, %v795
    %v797 = vpop.f32.mrb[0].mxu0
    %v798 = vpop.f32.mrb[0].mxu0
    %v799 = vadd.f32 0.0, %v798
    %v800 = vpop.f32.mrb[0].mxu0
    %801 = vdwg.mxu0
    %v802 = vadd.f32 %v435, %v676
    %v803 = vadd.f32 %v438, %v679
    %v804 = vadd.f32 %v443, %v684
    %v805 = vadd.f32 %v446, %v687
    %v806 = vadd.f32 %v451, %v692
    %v807 = vadd.f32 %v454, %v695
    %v808 = vadd.f32 %v459, %v700
    %v809 = vadd.f32 %v462, %v703
    %v810 = vadd.f32 %v467, %v708
    %v811 = vadd.f32 %v470, %v711
    %v812 = vadd.f32 %v475, %v716
    %v813 = vadd.f32 %v478, %v719
    %v814 = vadd.f32 %v483, %v724
    %v815 = vadd.f32 %v486, %v727
    %v816 = vadd.f32 %v491, %v732
    %v817 = vadd.f32 %v494, %v735
    %v818 = vadd.f32 %v499, %v740
    %v819 = vadd.f32 %v502, %v743
    %v820 = vadd.f32 %v507, %v748
    %v821 = vadd.f32 %v510, %v751
    %v822 = vadd.f32 %v515, %v756
    %v823 = vadd.f32 %v518, %v759
    %v824 = vadd.f32 %v523, %v764
    %v825 = vadd.f32 %v526, %v767
    %v826 = vadd.f32 %v531, %v772
    %v827 = vadd.f32 %v534, %v775
    %v828 = vadd.f32 %v539, %v780
    %v829 = vadd.f32 %v542, %v783
    %v830 = vadd.f32 %v547, %v788
    %v831 = vadd.f32 %v550, %v791
    %v832 = vadd.f32 %v555, %v796
    %v833 = vadd.f32 %v558, %v799
    %v834 = vmul.f32 %v47, %v47
    %v835 = vmul.f32 %v48, %v48
    %v836 = vmul.f32 %v49, %v49
    %v837 = vmul.f32 %v50, %v50
    %v838 = vmul.f32 %v51, %v51
    %v839 = vmul.f32 %v52, %v52
    %v840 = vmul.f32 %v53, %v53
    %v841 = vmul.f32 %v54, %v54
    %v842 = vmul.f32 %v55, %v55
    %v843 = vmul.f32 %v56, %v56
    %v844 = vmul.f32 %v57, %v57
    %v845 = vmul.f32 %v58, %v58
    %v846 = vmul.f32 %v59, %v59
    %v847 = vmul.f32 %v60, %v60
    %v848 = vmul.f32 %v61, %v61
    %v849 = vmul.f32 %v62, %v62
    %v850 = vmul.f32 %v63, %v63
    %v851 = vmul.f32 %v64, %v64
    %v852 = vmul.f32 %v65, %v65
    %v853 = vmul.f32 %v66, %v66
    %v854 = vmul.f32 %v67, %v67
    %v855 = vmul.f32 %v68, %v68
    %v856 = vmul.f32 %v69, %v69
    %v857 = vmul.f32 %v70, %v70
    %v858 = vmul.f32 %v71, %v71
    %v859 = vmul.f32 %v72, %v72
    %v860 = vmul.f32 %v73, %v73
    %v861 = vmul.f32 %v74, %v74
    %v862 = vmul.f32 %v75, %v75
    %v863 = vmul.f32 %v76, %v76
    %v864 = vmul.f32 %v77, %v77
    %v865 = vmul.f32 %v78, %v78
    %v866 = vpack.c.bf16 %v835, %v834
    %v867 = vpack.c.bf16 %v837, %v836
    %v868 = vpack.c.bf16 %v839, %v838
    %v869 = vpack.c.bf16 %v841, %v840
    %v870 = vpack.c.bf16 %v843, %v842
    %v871 = vpack.c.bf16 %v845, %v844
    %v872 = vpack.c.bf16 %v847, %v846
    %v873 = vpack.c.bf16 %v849, %v848
    %v874 = vpack.c.bf16 %v851, %v850
    %v875 = vpack.c.bf16 %v853, %v852
    %v876 = vpack.c.bf16 %v855, %v854
    %v877 = vpack.c.bf16 %v857, %v856
    %v878 = vpack.c.bf16 %v859, %v858
    %v879 = vpack.c.bf16 %v861, %v860
    %v880 = vpack.c.bf16 %v863, %v862
    %v881 = vpack.c.bf16 %v865, %v864
    %v882 = vunpack.c.l.bf16 %v866
    %v883 = vunpack.c.h.bf16 %v866
    %v884 = vunpack.c.l.bf16 %v867
    %v885 = vunpack.c.h.bf16 %v867
    %v886 = vunpack.c.l.bf16 %v868
    %v887 = vunpack.c.h.bf16 %v868
    %v888 = vunpack.c.l.bf16 %v869
    %v889 = vunpack.c.h.bf16 %v869
    %v890 = vunpack.c.l.bf16 %v870
    %v891 = vunpack.c.h.bf16 %v870
    %v892 = vunpack.c.l.bf16 %v871
    %v893 = vunpack.c.h.bf16 %v871
    %v894 = vunpack.c.l.bf16 %v872
    %v895 = vunpack.c.h.bf16 %v872
    %v896 = vunpack.c.l.bf16 %v873
    %v897 = vunpack.c.h.bf16 %v873
    %v898 = vunpack.c.l.bf16 %v874
    %v899 = vunpack.c.h.bf16 %v874
    %v900 = vunpack.c.l.bf16 %v875
    %v901 = vunpack.c.h.bf16 %v875
    %v902 = vunpack.c.l.bf16 %v876
    %v903 = vunpack.c.h.bf16 %v876
    %v904 = vunpack.c.l.bf16 %v877
    %v905 = vunpack.c.h.bf16 %v877
    %v906 = vunpack.c.l.bf16 %v878
    %v907 = vunpack.c.h.bf16 %v878
    %v908 = vunpack.c.l.bf16 %v879
    %v909 = vunpack.c.h.bf16 %v879
    %v910 = vunpack.c.l.bf16 %v880
    %v911 = vunpack.c.h.bf16 %v880
    %v912 = vunpack.c.l.bf16 %v881
    %v913 = vunpack.c.h.bf16 %v881
    %v914 = vsub.f32 %v834, %v882
    %v915 = vsub.f32 %v835, %v883
    %v916 = vsub.f32 %v836, %v884
    %v917 = vsub.f32 %v837, %v885
    %v918 = vsub.f32 %v838, %v886
    %v919 = vsub.f32 %v839, %v887
    %v920 = vsub.f32 %v840, %v888
    %v921 = vsub.f32 %v841, %v889
    %v922 = vsub.f32 %v842, %v890
    %v923 = vsub.f32 %v843, %v891
    %v924 = vsub.f32 %v844, %v892
    %v925 = vsub.f32 %v845, %v893
    %v926 = vsub.f32 %v846, %v894
    %v927 = vsub.f32 %v847, %v895
    %v928 = vsub.f32 %v848, %v896
    %v929 = vsub.f32 %v849, %v897
    %v930 = vsub.f32 %v850, %v898
    %v931 = vsub.f32 %v851, %v899
    %v932 = vsub.f32 %v852, %v900
    %v933 = vsub.f32 %v853, %v901
    %v934 = vsub.f32 %v854, %v902
    %v935 = vsub.f32 %v855, %v903
    %v936 = vsub.f32 %v856, %v904
    %v937 = vsub.f32 %v857, %v905
    %v938 = vsub.f32 %v858, %v906
    %v939 = vsub.f32 %v859, %v907
    %v940 = vsub.f32 %v860, %v908
    %v941 = vsub.f32 %v861, %v909
    %v942 = vsub.f32 %v862, %v910
    %v943 = vsub.f32 %v863, %v911
    %v944 = vsub.f32 %v864, %v912
    %v945 = vsub.f32 %v865, %v913
    %v946 = vpack.c.bf16 %v915, %v914
    %v947 = vpack.c.bf16 %v917, %v916
    %v948 = vpack.c.bf16 %v919, %v918
    %v949 = vpack.c.bf16 %v921, %v920
    %v950 = vpack.c.bf16 %v923, %v922
    %v951 = vpack.c.bf16 %v925, %v924
    %v952 = vpack.c.bf16 %v927, %v926
    %v953 = vpack.c.bf16 %v929, %v928
    %v954 = vpack.c.bf16 %v931, %v930
    %v955 = vpack.c.bf16 %v933, %v932
    %v956 = vpack.c.bf16 %v935, %v934
    %v957 = vpack.c.bf16 %v937, %v936
    %v958 = vpack.c.bf16 %v939, %v938
    %v959 = vpack.c.bf16 %v941, %v940
    %v960 = vpack.c.bf16 %v943, %v942
    %v961 = vpack.c.bf16 %v945, %v944
    %962 = vmatprep.subr.bf16.mxu0 0
    %963 = vmatpush1.bf16.msra.mxu0 %v223
    %964 = vmatprep.subr.bf16.mxu0 0
    %965 = vmatpush1.bf16.msra.mxu0 %v224
    %966 = vmatprep.subr.bf16.mxu0 0
    %967 = vmatpush1.bf16.msra.mxu0 %v225
    %968 = vmatprep.subr.bf16.mxu0 0
    %969 = vmatpush1.bf16.msra.mxu0 %v226
    %970 = vmatprep.subr.bf16.mxu0 0
    %971 = vmatpush1.bf16.msra.mxu0 %v227
    %972 = vmatprep.subr.bf16.mxu0 0
    %973 = vmatpush1.bf16.msra.mxu0 %v228
    %974 = vmatprep.subr.bf16.mxu0 0
    %975 = vmatpush1.bf16.msra.mxu0 %v229
    %976 = vmatprep.subr.bf16.mxu0 0
    %977 = vmatpush1.bf16.msra.mxu0 %v230
    %978 = vmatprep.subr.bf16.mxu0 0
    %979 = vmatpush1.bf16.msra.mxu0 0
    %980 = vmatprep.subr.bf16.mxu0 0
    %981 = vmatpush1.bf16.msra.mxu0 0
    %982 = vmatprep.subr.bf16.mxu0 0
    %983 = vmatpush1.bf16.msra.mxu0 0
    %984 = vmatprep.subr.bf16.mxu0 0
    %985 = vmatpush1.bf16.msra.mxu0 0
    %986 = vmatprep.subr.bf16.mxu0 0
    %987 = vmatpush1.bf16.msra.mxu0 0
    %988 = vmatprep.subr.bf16.mxu0 0
    %989 = vmatpush1.bf16.msra.mxu0 0
    %990 = vmatprep.subr.bf16.mxu0 0
    %991 = vmatpush1.bf16.msra.mxu0 0
    %992 = vmatprep.subr.bf16.mxu0 0
    %993 = vmatpush1.bf16.msra.mxu0 0
    %994 = vmatprep.mubr.bf16.mxu0 0
    %995 = vmatmul.mubr.bf16.gmra.mrb[0].mxu0 %v946
    %v996 = vpop.f32.mrb[0].mxu0
    %v997 = vadd.f32 0.0, %v996
    %v998 = vpop.f32.mrb[0].mxu0
    %v999 = vpop.f32.mrb[0].mxu0
    %v1000 = vadd.f32 0.0, %v999
    %v1001 = vpop.f32.mrb[0].mxu0
    %1002 = vmatprep.mubr.bf16.mxu0 0
    %1003 = vmatmul.mubr.bf16.gmra.mrb[0].mxu0 %v947
    %v1004 = vpop.f32.mrb[0].mxu0
    %v1005 = vadd.f32 0.0, %v1004
    %v1006 = vpop.f32.mrb[0].mxu0
    %v1007 = vpop.f32.mrb[0].mxu0
    %v1008 = vadd.f32 0.0, %v1007
    %v1009 = vpop.f32.mrb[0].mxu0
    %1010 = vmatprep.mubr.bf16.mxu0 0
    %1011 = vmatmul.mubr.bf16.gmra.mrb[0].mxu0 %v948
    %v1012 = vpop.f32.mrb[0].mxu0
    %v1013 = vadd.f32 0.0, %v1012
    %v1014 = vpop.f32.mrb[0].mxu0
    %v1015 = vpop.f32.mrb[0].mxu0
    %v1016 = vadd.f32 0.0, %v1015
    %v1017 = vpop.f32.mrb[0].mxu0
    %1018 = vmatprep.mubr.bf16.mxu0 0
    %1019 = vmatmul.mubr.bf16.gmra.mrb[0].mxu0 %v949
    %v1020 = vpop.f32.mrb[0].mxu0
    %v1021 = vadd.f32 0.0, %v1020
    %v1022 = vpop.f32.mrb[0].mxu0
    %v1023 = vpop.f32.mrb[0].mxu0
    %v1024 = vadd.f32 0.0, %v1023
    %v1025 = vpop.f32.mrb[0].mxu0
    %1026 = vmatprep.mubr.bf16.mxu0 0
    %1027 = vmatmul.mubr.bf16.gmra.mrb[0].mxu0 %v950
    %v1028 = vpop.f32.mrb[0].mxu0
    %v1029 = vadd.f32 0.0, %v1028
    %v1030 = vpop.f32.mrb[0].mxu0
    %v1031 = vpop.f32.mrb[0].mxu0
    %v1032 = vadd.f32 0.0, %v1031
    %v1033 = vpop.f32.mrb[0].mxu0
    %1034 = vmatprep.mubr.bf16.mxu0 0
    %1035 = vmatmul.mubr.bf16.gmra.mrb[0].mxu0 %v951
    %v1036 = vpop.f32.mrb[0].mxu0
    %v1037 = vadd.f32 0.0, %v1036
    %v1038 = vpop.f32.mrb[0].mxu0
    %v1039 = vpop.f32.mrb[0].mxu0
    %v1040 = vadd.f32 0.0, %v1039
    %v1041 = vpop.f32.mrb[0].mxu0
    %1042 = vmatprep.mubr.bf16.mxu0 0
    %1043 = vmatmul.mubr.bf16.gmra.mrb[0].mxu0 %v952
    %v1044 = vpop.f32.mrb[0].mxu0
    %v1045 = vadd.f32 0.0, %v1044
    %v1046 = vpop.f32.mrb[0].mxu0
    %v1047 = vpop.f32.mrb[0].mxu0
    %v1048 = vadd.f32 0.0, %v1047
    %v1049 = vpop.f32.mrb[0].mxu0
    %1050 = vmatprep.mubr.bf16.mxu0 0
    %1051 = vmatmul.mubr.bf16.gmra.mrb[0].mxu0 %v953
    %v1052 = vpop.f32.mrb[0].mxu0
    %v1053 = vadd.f32 0.0, %v1052
    %v1054 = vpop.f32.mrb[0].mxu0
    %v1055 = vpop.f32.mrb[0].mxu0
    %v1056 = vadd.f32 0.0, %v1055
    %v1057 = vpop.f32.mrb[0].mxu0
    %1058 = vmatprep.mubr.bf16.mxu0 0
    %1059 = vmatmul.mubr.bf16.gmra.mrb[0].mxu0 %v954
    %v1060 = vpop.f32.mrb[0].mxu0
    %v1061 = vadd.f32 0.0, %v1060
    %v1062 = vpop.f32.mrb[0].mxu0
    %v1063 = vpop.f32.mrb[0].mxu0
    %v1064 = vadd.f32 0.0, %v1063
    %v1065 = vpop.f32.mrb[0].mxu0
    %1066 = vmatprep.mubr.bf16.mxu0 0
    %1067 = vmatmul.mubr.bf16.gmra.mrb[0].mxu0 %v955
    %v1068 = vpop.f32.mrb[0].mxu0
    %v1069 = vadd.f32 0.0, %v1068
    %v1070 = vpop.f32.mrb[0].mxu0
    %v1071 = vpop.f32.mrb[0].mxu0
    %v1072 = vadd.f32 0.0, %v1071
    %v1073 = vpop.f32.mrb[0].mxu0
    %1074 = vmatprep.mubr.bf16.mxu0 0
    %1075 = vmatmul.mubr.bf16.gmra.mrb[0].mxu0 %v956
    %v1076 = vpop.f32.mrb[0].mxu0
    %v1077 = vadd.f32 0.0, %v1076
    %v1078 = vpop.f32.mrb[0].mxu0
    %v1079 = vpop.f32.mrb[0].mxu0
    %v1080 = vadd.f32 0.0, %v1079
    %v1081 = vpop.f32.mrb[0].mxu0
    %1082 = vmatprep.mubr.bf16.mxu0 0
    %1083 = vmatmul.mubr.bf16.gmra.mrb[0].mxu0 %v957
    %v1084 = vpop.f32.mrb[0].mxu0
    %v1085 = vadd.f32 0.0, %v1084
    %v1086 = vpop.f32.mrb[0].mxu0
    %v1087 = vpop.f32.mrb[0].mxu0
    %v1088 = vadd.f32 0.0, %v1087
    %v1089 = vpop.f32.mrb[0].mxu0
    %1090 = vmatprep.mubr.bf16.mxu0 0
    %1091 = vmatmul.mubr.bf16.gmra.mrb[0].mxu0 %v958
    %v1092 = vpop.f32.mrb[0].mxu0
    %v1093 = vadd.f32 0.0, %v1092
    %v1094 = vpop.f32.mrb[0].mxu0
    %v1095 = vpop.f32.mrb[0].mxu0
    %v1096 = vadd.f32 0.0, %v1095
    %v1097 = vpop.f32.mrb[0].mxu0
    %1098 = vmatprep.mubr.bf16.mxu0 0
    %1099 = vmatmul.mubr.bf16.gmra.mrb[0].mxu0 %v959
    %v1100 = vpop.f32.mrb[0].mxu0
    %v1101 = vadd.f32 0.0, %v1100
    %v1102 = vpop.f32.mrb[0].mxu0
    %v1103 = vpop.f32.mrb[0].mxu0
    %v1104 = vadd.f32 0.0, %v1103
    %v1105 = vpop.f32.mrb[0].mxu0
    %1106 = vmatprep.mubr.bf16.mxu0 0
    %1107 = vmatmul.mubr.bf16.gmra.mrb[0].mxu0 %v960
    %v1108 = vpop.f32.mrb[0].mxu0
    %v1109 = vadd.f32 0.0, %v1108
    %v1110 = vpop.f32.mrb[0].mxu0
    %v1111 = vpop.f32.mrb[0].mxu0
    %v1112 = vadd.f32 0.0, %v1111
    %v1113 = vpop.f32.mrb[0].mxu0
    %1114 = vmatprep.mubr.bf16.mxu0 0
    %1115 = vmatmul.mubr.bf16.gmra.mrb[0].mxu0 %v961
    %v1116 = vpop.f32.mrb[0].mxu0
    %v1117 = vadd.f32 0.0, %v1116
    %v1118 = vpop.f32.mrb[0].mxu0
    %v1119 = vpop.f32.mrb[0].mxu0
    %v1120 = vadd.f32 0.0, %v1119
    %v1121 = vpop.f32.mrb[0].mxu0
    %1122 = vdwg.mxu0
    %1123 = vmatprep.subr.bf16.mxu0 0
    %1124 = vmatpush1.bf16.msra.mxu0 %v223
    %1125 = vmatprep.subr.bf16.mxu0 0
    %1126 = vmatpush1.bf16.msra.mxu0 %v224
    %1127 = vmatprep.subr.bf16.mxu0 0
    %1128 = vmatpush1.bf16.msra.mxu0 %v225
    %1129 = vmatprep.subr.bf16.mxu0 0
    %1130 = vmatpush1.bf16.msra.mxu0 %v226
    %1131 = vmatprep.subr.bf16.mxu0 0
    %1132 = vmatpush1.bf16.msra.mxu0 %v227
    %1133 = vmatprep.subr.bf16.mxu0 0
    %1134 = vmatpush1.bf16.msra.mxu0 %v228
    %1135 = vmatprep.subr.bf16.mxu0 0
    %1136 = vmatpush1.bf16.msra.mxu0 %v229
    %1137 = vmatprep.subr.bf16.mxu0 0
    %1138 = vmatpush1.bf16.msra.mxu0 %v230
    %1139 = vmatprep.subr.bf16.mxu0 0
    %1140 = vmatpush1.bf16.msra.mxu0 0
    %1141 = vmatprep.subr.bf16.mxu0 0
    %1142 = vmatpush1.bf16.msra.mxu0 0
    %1143 = vmatprep.subr.bf16.mxu0 0
    %1144 = vmatpush1.bf16.msra.mxu0 0
    %1145 = vmatprep.subr.bf16.mxu0 0
    %1146 = vmatpush1.bf16.msra.mxu0 0
    %1147 = vmatprep.subr.bf16.mxu0 0
    %1148 = vmatpush1.bf16.msra.mxu0 0
    %1149 = vmatprep.subr.bf16.mxu0 0
    %1150 = vmatpush1.bf16.msra.mxu0 0
    %1151 = vmatprep.subr.bf16.mxu0 0
    %1152 = vmatpush1.bf16.msra.mxu0 0
    %1153 = vmatprep.subr.bf16.mxu0 0
    %1154 = vmatpush1.bf16.msra.mxu0 0
    %1155 = vmatprep.mubr.bf16.mxu0 0
    %1156 = vmatmul.mubr.bf16.gmra.mrb[0].mxu0 %v866
    %v1157 = vpop.f32.mrb[0].mxu0
    %v1158 = vadd.f32 %v997, %v1157
    %v1159 = vpop.f32.mrb[0].mxu0
    %v1160 = vpop.f32.mrb[0].mxu0
    %v1161 = vadd.f32 %v1000, %v1160
    %v1162 = vpop.f32.mrb[0].mxu0
    %1163 = vmatprep.mubr.bf16.mxu0 0
    %1164 = vmatmul.mubr.bf16.gmra.mrb[0].mxu0 %v867
    %v1165 = vpop.f32.mrb[0].mxu0
    %v1166 = vadd.f32 %v1005, %v1165
    %v1167 = vpop.f32.mrb[0].mxu0
    %v1168 = vpop.f32.mrb[0].mxu0
    %v1169 = vadd.f32 %v1008, %v1168
    %v1170 = vpop.f32.mrb[0].mxu0
    %1171 = vmatprep.mubr.bf16.mxu0 0
    %1172 = vmatmul.mubr.bf16.gmra.mrb[0].mxu0 %v868
    %v1173 = vpop.f32.mrb[0].mxu0
    %v1174 = vadd.f32 %v1013, %v1173
    %v1175 = vpop.f32.mrb[0].mxu0
    %v1176 = vpop.f32.mrb[0].mxu0
    %v1177 = vadd.f32 %v1016, %v1176
    %v1178 = vpop.f32.mrb[0].mxu0
    %1179 = vmatprep.mubr.bf16.mxu0 0
    %1180 = vmatmul.mubr.bf16.gmra.mrb[0].mxu0 %v869
    %v1181 = vpop.f32.mrb[0].mxu0
    %v1182 = vadd.f32 %v1021, %v1181
    %v1183 = vpop.f32.mrb[0].mxu0
    %v1184 = vpop.f32.mrb[0].mxu0
    %v1185 = vadd.f32 %v1024, %v1184
    %v1186 = vpop.f32.mrb[0].mxu0
    %1187 = vmatprep.mubr.bf16.mxu0 0
    %1188 = vmatmul.mubr.bf16.gmra.mrb[0].mxu0 %v870
    %v1189 = vpop.f32.mrb[0].mxu0
    %v1190 = vadd.f32 %v1029, %v1189
    %v1191 = vpop.f32.mrb[0].mxu0
    %v1192 = vpop.f32.mrb[0].mxu0
    %v1193 = vadd.f32 %v1032, %v1192
    %v1194 = vpop.f32.mrb[0].mxu0
    %1195 = vmatprep.mubr.bf16.mxu0 0
    %1196 = vmatmul.mubr.bf16.gmra.mrb[0].mxu0 %v871
    %v1197 = vpop.f32.mrb[0].mxu0
    %v1198 = vadd.f32 %v1037, %v1197
    %v1199 = vpop.f32.mrb[0].mxu0
    %v1200 = vpop.f32.mrb[0].mxu0
    %v1201 = vadd.f32 %v1040, %v1200
    %v1202 = vpop.f32.mrb[0].mxu0
    %1203 = vmatprep.mubr.bf16.mxu0 0
    %1204 = vmatmul.mubr.bf16.gmra.mrb[0].mxu0 %v872
    %v1205 = vpop.f32.mrb[0].mxu0
    %v1206 = vadd.f32 %v1045, %v1205
    %v1207 = vpop.f32.mrb[0].mxu0
    %v1208 = vpop.f32.mrb[0].mxu0
    %v1209 = vadd.f32 %v1048, %v1208
    %v1210 = vpop.f32.mrb[0].mxu0
    %1211 = vmatprep.mubr.bf16.mxu0 0
    %1212 = vmatmul.mubr.bf16.gmra.mrb[0].mxu0 %v873
    %v1213 = vpop.f32.mrb[0].mxu0
    %v1214 = vadd.f32 %v1053, %v1213
    %v1215 = vpop.f32.mrb[0].mxu0
    %v1216 = vpop.f32.mrb[0].mxu0
    %v1217 = vadd.f32 %v1056, %v1216
    %v1218 = vpop.f32.mrb[0].mxu0
    %1219 = vmatprep.mubr.bf16.mxu0 0
    %1220 = vmatmul.mubr.bf16.gmra.mrb[0].mxu0 %v874
    %v1221 = vpop.f32.mrb[0].mxu0
    %v1222 = vadd.f32 %v1061, %v1221
    %v1223 = vpop.f32.mrb[0].mxu0
    %v1224 = vpop.f32.mrb[0].mxu0
    %v1225 = vadd.f32 %v1064, %v1224
    %v1226 = vpop.f32.mrb[0].mxu0
    %1227 = vmatprep.mubr.bf16.mxu0 0
    %1228 = vmatmul.mubr.bf16.gmra.mrb[0].mxu0 %v875
    %v1229 = vpop.f32.mrb[0].mxu0
    %v1230 = vadd.f32 %v1069, %v1229
    %v1231 = vpop.f32.mrb[0].mxu0
    %v1232 = vpop.f32.mrb[0].mxu0
    %v1233 = vadd.f32 %v1072, %v1232
    %v1234 = vpop.f32.mrb[0].mxu0
    %1235 = vmatprep.mubr.bf16.mxu0 0
    %1236 = vmatmul.mubr.bf16.gmra.mrb[0].mxu0 %v876
    %v1237 = vpop.f32.mrb[0].mxu0
    %v1238 = vadd.f32 %v1077, %v1237
    %v1239 = vpop.f32.mrb[0].mxu0
    %v1240 = vpop.f32.mrb[0].mxu0
    %v1241 = vadd.f32 %v1080, %v1240
    %v1242 = vpop.f32.mrb[0].mxu0
    %1243 = vmatprep.mubr.bf16.mxu0 0
    %1244 = vmatmul.mubr.bf16.gmra.mrb[0].mxu0 %v877
    %v1245 = vpop.f32.mrb[0].mxu0
    %v1246 = vadd.f32 %v1085, %v1245
    %v1247 = vpop.f32.mrb[0].mxu0
    %v1248 = vpop.f32.mrb[0].mxu0
    %v1249 = vadd.f32 %v1088, %v1248
    %v1250 = vpop.f32.mrb[0].mxu0
    %1251 = vmatprep.mubr.bf16.mxu0 0
    %1252 = vmatmul.mubr.bf16.gmra.mrb[0].mxu0 %v878
    %v1253 = vpop.f32.mrb[0].mxu0
    %v1254 = vadd.f32 %v1093, %v1253
    %v1255 = vpop.f32.mrb[0].mxu0
    %v1256 = vpop.f32.mrb[0].mxu0
    %v1257 = vadd.f32 %v1096, %v1256
    %v1258 = vpop.f32.mrb[0].mxu0
    %1259 = vmatprep.mubr.bf16.mxu0 0
    %1260 = vmatmul.mubr.bf16.gmra.mrb[0].mxu0 %v879
    %v1261 = vpop.f32.mrb[0].mxu0
    %v1262 = vadd.f32 %v1101, %v1261
    %v1263 = vpop.f32.mrb[0].mxu0
    %v1264 = vpop.f32.mrb[0].mxu0
    %v1265 = vadd.f32 %v1104, %v1264
    %v1266 = vpop.f32.mrb[0].mxu0
    %1267 = vmatprep.mubr.bf16.mxu0 0
    %1268 = vmatmul.mubr.bf16.gmra.mrb[0].mxu0 %v880
    %v1269 = vpop.f32.mrb[0].mxu0
    %v1270 = vadd.f32 %v1109, %v1269
    %v1271 = vpop.f32.mrb[0].mxu0
    %v1272 = vpop.f32.mrb[0].mxu0
    %v1273 = vadd.f32 %v1112, %v1272
    %v1274 = vpop.f32.mrb[0].mxu0
    %1275 = vmatprep.mubr.bf16.mxu0 0
    %1276 = vmatmul.mubr.bf16.gmra.mrb[0].mxu0 %v881
    %v1277 = vpop.f32.mrb[0].mxu0
    %v1278 = vadd.f32 %v1117, %v1277
    %v1279 = vpop.f32.mrb[0].mxu0
    %v1280 = vpop.f32.mrb[0].mxu0
    %v1281 = vadd.f32 %v1120, %v1280
    %v1282 = vpop.f32.mrb[0].mxu0
    %1283 = vdwg.mxu0
    %v1284 = vunpack.c.l.bf16 %v946
    %v1285 = vunpack.c.h.bf16 %v946
    %v1286 = vunpack.c.l.bf16 %v947
    %v1287 = vunpack.c.h.bf16 %v947
    %v1288 = vunpack.c.l.bf16 %v948
    %v1289 = vunpack.c.h.bf16 %v948
    %v1290 = vunpack.c.l.bf16 %v949
    %v1291 = vunpack.c.h.bf16 %v949
    %v1292 = vunpack.c.l.bf16 %v950
    %v1293 = vunpack.c.h.bf16 %v950
    %v1294 = vunpack.c.l.bf16 %v951
    %v1295 = vunpack.c.h.bf16 %v951
    %v1296 = vunpack.c.l.bf16 %v952
    %v1297 = vunpack.c.h.bf16 %v952
    %v1298 = vunpack.c.l.bf16 %v953
    %v1299 = vunpack.c.h.bf16 %v953
    %v1300 = vunpack.c.l.bf16 %v954
    %v1301 = vunpack.c.h.bf16 %v954
    %v1302 = vunpack.c.l.bf16 %v955
    %v1303 = vunpack.c.h.bf16 %v955
    %v1304 = vunpack.c.l.bf16 %v956
    %v1305 = vunpack.c.h.bf16 %v956
    %v1306 = vunpack.c.l.bf16 %v957
    %v1307 = vunpack.c.h.bf16 %v957
    %v1308 = vunpack.c.l.bf16 %v958
    %v1309 = vunpack.c.h.bf16 %v958
    %v1310 = vunpack.c.l.bf16 %v959
    %v1311 = vunpack.c.h.bf16 %v959
    %v1312 = vunpack.c.l.bf16 %v960
    %v1313 = vunpack.c.h.bf16 %v960
    %v1314 = vunpack.c.l.bf16 %v961
    %v1315 = vunpack.c.h.bf16 %v961
    %v1316 = vsub.f32 %v914, %v1284
    %v1317 = vsub.f32 %v915, %v1285
    %v1318 = vsub.f32 %v916, %v1286
    %v1319 = vsub.f32 %v917, %v1287
    %v1320 = vsub.f32 %v918, %v1288
    %v1321 = vsub.f32 %v919, %v1289
    %v1322 = vsub.f32 %v920, %v1290
    %v1323 = vsub.f32 %v921, %v1291
    %v1324 = vsub.f32 %v922, %v1292
    %v1325 = vsub.f32 %v923, %v1293
    %v1326 = vsub.f32 %v924, %v1294
    %v1327 = vsub.f32 %v925, %v1295
    %v1328 = vsub.f32 %v926, %v1296
    %v1329 = vsub.f32 %v927, %v1297
    %v1330 = vsub.f32 %v928, %v1298
    %v1331 = vsub.f32 %v929, %v1299
    %v1332 = vsub.f32 %v930, %v1300
    %v1333 = vsub.f32 %v931, %v1301
    %v1334 = vsub.f32 %v932, %v1302
    %v1335 = vsub.f32 %v933, %v1303
    %v1336 = vsub.f32 %v934, %v1304
    %v1337 = vsub.f32 %v935, %v1305
    %v1338 = vsub.f32 %v936, %v1306
    %v1339 = vsub.f32 %v937, %v1307
    %v1340 = vsub.f32 %v938, %v1308
    %v1341 = vsub.f32 %v939, %v1309
    %v1342 = vsub.f32 %v940, %v1310
    %v1343 = vsub.f32 %v941, %v1311
    %v1344 = vsub.f32 %v942, %v1312
    %v1345 = vsub.f32 %v943, %v1313
    %v1346 = vsub.f32 %v944, %v1314
    %v1347 = vsub.f32 %v945, %v1315
    %v1348 = vpack.c.bf16 %v1317, %v1316
    %v1349 = vpack.c.bf16 %v1319, %v1318
    %v1350 = vpack.c.bf16 %v1321, %v1320
    %v1351 = vpack.c.bf16 %v1323, %v1322
    %v1352 = vpack.c.bf16 %v1325, %v1324
    %v1353 = vpack.c.bf16 %v1327, %v1326
    %v1354 = vpack.c.bf16 %v1329, %v1328
    %v1355 = vpack.c.bf16 %v1331, %v1330
    %v1356 = vpack.c.bf16 %v1333, %v1332
    %v1357 = vpack.c.bf16 %v1335, %v1334
    %v1358 = vpack.c.bf16 %v1337, %v1336
    %v1359 = vpack.c.bf16 %v1339, %v1338
    %v1360 = vpack.c.bf16 %v1341, %v1340
    %v1361 = vpack.c.bf16 %v1343, %v1342
    %v1362 = vpack.c.bf16 %v1345, %v1344
    %v1363 = vpack.c.bf16 %v1347, %v1346
    %1364 = vmatprep.subr.bf16.mxu0 0
    %1365 = vmatpush1.bf16.msra.mxu0 %v223
    %1366 = vmatprep.subr.bf16.mxu0 0
    %1367 = vmatpush1.bf16.msra.mxu0 %v224
    %1368 = vmatprep.subr.bf16.mxu0 0
    %1369 = vmatpush1.bf16.msra.mxu0 %v225
    %1370 = vmatprep.subr.bf16.mxu0 0
    %1371 = vmatpush1.bf16.msra.mxu0 %v226
    %1372 = vmatprep.subr.bf16.mxu0 0
    %1373 = vmatpush1.bf16.msra.mxu0 %v227
    %1374 = vmatprep.subr.bf16.mxu0 0
    %1375 = vmatpush1.bf16.msra.mxu0 %v228
    %1376 = vmatprep.subr.bf16.mxu0 0
    %1377 = vmatpush1.bf16.msra.mxu0 %v229
    %1378 = vmatprep.subr.bf16.mxu0 0
    %1379 = vmatpush1.bf16.msra.mxu0 %v230
    %1380 = vmatprep.subr.bf16.mxu0 0
    %1381 = vmatpush1.bf16.msra.mxu0 0
    %1382 = vmatprep.subr.bf16.mxu0 0
    %1383 = vmatpush1.bf16.msra.mxu0 0
    %1384 = vmatprep.subr.bf16.mxu0 0
    %1385 = vmatpush1.bf16.msra.mxu0 0
    %1386 = vmatprep.subr.bf16.mxu0 0
    %1387 = vmatpush1.bf16.msra.mxu0 0
    %1388 = vmatprep.subr.bf16.mxu0 0
    %1389 = vmatpush1.bf16.msra.mxu0 0
    %1390 = vmatprep.subr.bf16.mxu0 0
    %1391 = vmatpush1.bf16.msra.mxu0 0
    %1392 = vmatprep.subr.bf16.mxu0 0
    %1393 = vmatpush1.bf16.msra.mxu0 0
    %1394 = vmatprep.subr.bf16.mxu0 0
    %1395 = vmatpush1.bf16.msra.mxu0 0
    %1396 = vmatprep.mubr.bf16.mxu0 0
    %1397 = vmatmul.mubr.bf16.gmra.mrb[0].mxu0 %v1348
    %v1398 = vpop.f32.mrb[0].mxu0
    %v1399 = vadd.f32 0.0, %v1398
    %v1400 = vpop.f32.mrb[0].mxu0
    %v1401 = vpop.f32.mrb[0].mxu0
    %v1402 = vadd.f32 0.0, %v1401
    %v1403 = vpop.f32.mrb[0].mxu0
    %1404 = vmatprep.mubr.bf16.mxu0 0
    %1405 = vmatmul.mubr.bf16.gmra.mrb[0].mxu0 %v1349
    %v1406 = vpop.f32.mrb[0].mxu0
    %v1407 = vadd.f32 0.0, %v1406
    %v1408 = vpop.f32.mrb[0].mxu0
    %v1409 = vpop.f32.mrb[0].mxu0
    %v1410 = vadd.f32 0.0, %v1409
    %v1411 = vpop.f32.mrb[0].mxu0
    %1412 = vmatprep.mubr.bf16.mxu0 0
    %1413 = vmatmul.mubr.bf16.gmra.mrb[0].mxu0 %v1350
    %v1414 = vpop.f32.mrb[0].mxu0
    %v1415 = vadd.f32 0.0, %v1414
    %v1416 = vpop.f32.mrb[0].mxu0
    %v1417 = vpop.f32.mrb[0].mxu0
    %v1418 = vadd.f32 0.0, %v1417
    %v1419 = vpop.f32.mrb[0].mxu0
    %1420 = vmatprep.mubr.bf16.mxu0 0
    %1421 = vmatmul.mubr.bf16.gmra.mrb[0].mxu0 %v1351
    %v1422 = vpop.f32.mrb[0].mxu0
    %v1423 = vadd.f32 0.0, %v1422
    %v1424 = vpop.f32.mrb[0].mxu0
    %v1425 = vpop.f32.mrb[0].mxu0
    %v1426 = vadd.f32 0.0, %v1425
    %v1427 = vpop.f32.mrb[0].mxu0
    %1428 = vmatprep.mubr.bf16.mxu0 0
    %1429 = vmatmul.mubr.bf16.gmra.mrb[0].mxu0 %v1352
    %v1430 = vpop.f32.mrb[0].mxu0
    %v1431 = vadd.f32 0.0, %v1430
    %v1432 = vpop.f32.mrb[0].mxu0
    %v1433 = vpop.f32.mrb[0].mxu0
    %v1434 = vadd.f32 0.0, %v1433
    %v1435 = vpop.f32.mrb[0].mxu0
    %1436 = vmatprep.mubr.bf16.mxu0 0
    %1437 = vmatmul.mubr.bf16.gmra.mrb[0].mxu0 %v1353
    %v1438 = vpop.f32.mrb[0].mxu0
    %v1439 = vadd.f32 0.0, %v1438
    %v1440 = vpop.f32.mrb[0].mxu0
    %v1441 = vpop.f32.mrb[0].mxu0
    %v1442 = vadd.f32 0.0, %v1441
    %v1443 = vpop.f32.mrb[0].mxu0
    %1444 = vmatprep.mubr.bf16.mxu0 0
    %1445 = vmatmul.mubr.bf16.gmra.mrb[0].mxu0 %v1354
    %v1446 = vpop.f32.mrb[0].mxu0
    %v1447 = vadd.f32 0.0, %v1446
    %v1448 = vpop.f32.mrb[0].mxu0
    %v1449 = vpop.f32.mrb[0].mxu0
    %v1450 = vadd.f32 0.0, %v1449
    %v1451 = vpop.f32.mrb[0].mxu0
    %1452 = vmatprep.mubr.bf16.mxu0 0
    %1453 = vmatmul.mubr.bf16.gmra.mrb[0].mxu0 %v1355
    %v1454 = vpop.f32.mrb[0].mxu0
    %v1455 = vadd.f32 0.0, %v1454
    %v1456 = vpop.f32.mrb[0].mxu0
    %v1457 = vpop.f32.mrb[0].mxu0
    %v1458 = vadd.f32 0.0, %v1457
    %v1459 = vpop.f32.mrb[0].mxu0
    %1460 = vmatprep.mubr.bf16.mxu0 0
    %1461 = vmatmul.mubr.bf16.gmra.mrb[0].mxu0 %v1356
    %v1462 = vpop.f32.mrb[0].mxu0
    %v1463 = vadd.f32 0.0, %v1462
    %v1464 = vpop.f32.mrb[0].mxu0
    %v1465 = vpop.f32.mrb[0].mxu0
    %v1466 = vadd.f32 0.0, %v1465
    %v1467 = vpop.f32.mrb[0].mxu0
    %1468 = vmatprep.mubr.bf16.mxu0 0
    %1469 = vmatmul.mubr.bf16.gmra.mrb[0].mxu0 %v1357
    %v1470 = vpop.f32.mrb[0].mxu0
    %v1471 = vadd.f32 0.0, %v1470
    %v1472 = vpop.f32.mrb[0].mxu0
    %v1473 = vpop.f32.mrb[0].mxu0
    %v1474 = vadd.f32 0.0, %v1473
    %v1475 = vpop.f32.mrb[0].mxu0
    %1476 = vmatprep.mubr.bf16.mxu0 0
    %1477 = vmatmul.mubr.bf16.gmra.mrb[0].mxu0 %v1358
    %v1478 = vpop.f32.mrb[0].mxu0
    %v1479 = vadd.f32 0.0, %v1478
    %v1480 = vpop.f32.mrb[0].mxu0
    %v1481 = vpop.f32.mrb[0].mxu0
    %v1482 = vadd.f32 0.0, %v1481
    %v1483 = vpop.f32.mrb[0].mxu0
    %1484 = vmatprep.mubr.bf16.mxu0 0
    %1485 = vmatmul.mubr.bf16.gmra.mrb[0].mxu0 %v1359
    %v1486 = vpop.f32.mrb[0].mxu0
    %v1487 = vadd.f32 0.0, %v1486
    %v1488 = vpop.f32.mrb[0].mxu0
    %v1489 = vpop.f32.mrb[0].mxu0
    %v1490 = vadd.f32 0.0, %v1489
    %v1491 = vpop.f32.mrb[0].mxu0
    %1492 = vmatprep.mubr.bf16.mxu0 0
    %1493 = vmatmul.mubr.bf16.gmra.mrb[0].mxu0 %v1360
    %v1494 = vpop.f32.mrb[0].mxu0
    %v1495 = vadd.f32 0.0, %v1494
    %v1496 = vpop.f32.mrb[0].mxu0
    %v1497 = vpop.f32.mrb[0].mxu0
    %v1498 = vadd.f32 0.0, %v1497
    %v1499 = vpop.f32.mrb[0].mxu0
    %1500 = vmatprep.mubr.bf16.mxu0 0
    %1501 = vmatmul.mubr.bf16.gmra.mrb[0].mxu0 %v1361
    %v1502 = vpop.f32.mrb[0].mxu0
    %v1503 = vadd.f32 0.0, %v1502
    %v1504 = vpop.f32.mrb[0].mxu0
    %v1505 = vpop.f32.mrb[0].mxu0
    %v1506 = vadd.f32 0.0, %v1505
    %v1507 = vpop.f32.mrb[0].mxu0
    %1508 = vmatprep.mubr.bf16.mxu0 0
    %1509 = vmatmul.mubr.bf16.gmra.mrb[0].mxu0 %v1362
    %v1510 = vpop.f32.mrb[0].mxu0
    %v1511 = vadd.f32 0.0, %v1510
    %v1512 = vpop.f32.mrb[0].mxu0
    %v1513 = vpop.f32.mrb[0].mxu0
    %v1514 = vadd.f32 0.0, %v1513
    %v1515 = vpop.f32.mrb[0].mxu0
    %1516 = vmatprep.mubr.bf16.mxu0 0
    %1517 = vmatmul.mubr.bf16.gmra.mrb[0].mxu0 %v1363
    %v1518 = vpop.f32.mrb[0].mxu0
    %v1519 = vadd.f32 0.0, %v1518
    %v1520 = vpop.f32.mrb[0].mxu0
    %v1521 = vpop.f32.mrb[0].mxu0
    %v1522 = vadd.f32 0.0, %v1521
    %v1523 = vpop.f32.mrb[0].mxu0
    %1524 = vdwg.mxu0
    %v1525 = vadd.f32 %v1158, %v1399
    %v1526 = vadd.f32 %v1161, %v1402
    %v1527 = vadd.f32 %v1166, %v1407
    %v1528 = vadd.f32 %v1169, %v1410
    %v1529 = vadd.f32 %v1174, %v1415
    %v1530 = vadd.f32 %v1177, %v1418
    %v1531 = vadd.f32 %v1182, %v1423
    %v1532 = vadd.f32 %v1185, %v1426
    %v1533 = vadd.f32 %v1190, %v1431
    %v1534 = vadd.f32 %v1193, %v1434
    %v1535 = vadd.f32 %v1198, %v1439
    %v1536 = vadd.f32 %v1201, %v1442
    %v1537 = vadd.f32 %v1206, %v1447
    %v1538 = vadd.f32 %v1209, %v1450
    %v1539 = vadd.f32 %v1214, %v1455
    %v1540 = vadd.f32 %v1217, %v1458
    %v1541 = vadd.f32 %v1222, %v1463
    %v1542 = vadd.f32 %v1225, %v1466
    %v1543 = vadd.f32 %v1230, %v1471
    %v1544 = vadd.f32 %v1233, %v1474
    %v1545 = vadd.f32 %v1238, %v1479
    %v1546 = vadd.f32 %v1241, %v1482
    %v1547 = vadd.f32 %v1246, %v1487
    %v1548 = vadd.f32 %v1249, %v1490
    %v1549 = vadd.f32 %v1254, %v1495
    %v1550 = vadd.f32 %v1257, %v1498
    %v1551 = vadd.f32 %v1262, %v1503
    %v1552 = vadd.f32 %v1265, %v1506
    %v1553 = vadd.f32 %v1270, %v1511
    %v1554 = vadd.f32 %v1273, %v1514
    %v1555 = vadd.f32 %v1278, %v1519
    %v1556 = vadd.f32 %v1281, %v1522
    %v1557 = vmul.f32 %v802, 0.03125
    %v1558 = vmul.f32 %v803, 0.03125
    %v1559 = vmul.f32 %v804, 0.03125
    %v1560 = vmul.f32 %v805, 0.03125
    %v1561 = vmul.f32 %v806, 0.03125
    %v1562 = vmul.f32 %v807, 0.03125
    %v1563 = vmul.f32 %v808, 0.03125
    %v1564 = vmul.f32 %v809, 0.03125
    %v1565 = vmul.f32 %v810, 0.03125
    %v1566 = vmul.f32 %v811, 0.03125
    %v1567 = vmul.f32 %v812, 0.03125
    %v1568 = vmul.f32 %v813, 0.03125
    %v1569 = vmul.f32 %v814, 0.03125
    %v1570 = vmul.f32 %v815, 0.03125
    %v1571 = vmul.f32 %v816, 0.03125
    %v1572 = vmul.f32 %v817, 0.03125
    %v1573 = vmul.f32 %v818, 0.03125
    %v1574 = vmul.f32 %v819, 0.03125
    %v1575 = vmul.f32 %v820, 0.03125
    %v1576 = vmul.f32 %v821, 0.03125
    %v1577 = vmul.f32 %v822, 0.03125
    %v1578 = vmul.f32 %v823, 0.03125
    %v1579 = vmul.f32 %v824, 0.03125
    %v1580 = vmul.f32 %v825, 0.03125
    %v1581 = vmul.f32 %v826, 0.03125
    %v1582 = vmul.f32 %v827, 0.03125
    %v1583 = vmul.f32 %v828, 0.03125
    %v1584 = vmul.f32 %v829, 0.03125
    %v1585 = vmul.f32 %v830, 0.03125
    %v1586 = vmul.f32 %v831, 0.03125
    %v1587 = vmul.f32 %v832, 0.03125
    %v1588 = vmul.f32 %v833, 0.03125
    %v1589 = vmul.f32 %v1525, 0.03125
    %v1590 = vmul.f32 %v1526, 0.03125
    %v1591 = vmul.f32 %v1527, 0.03125
    %v1592 = vmul.f32 %v1528, 0.03125
    %v1593 = vmul.f32 %v1529, 0.03125
    %v1594 = vmul.f32 %v1530, 0.03125
    %v1595 = vmul.f32 %v1531, 0.03125
    %v1596 = vmul.f32 %v1532, 0.03125
    %v1597 = vmul.f32 %v1533, 0.03125
    %v1598 = vmul.f32 %v1534, 0.03125
    %v1599 = vmul.f32 %v1535, 0.03125
    %v1600 = vmul.f32 %v1536, 0.03125
    %v1601 = vmul.f32 %v1537, 0.03125
    %v1602 = vmul.f32 %v1538, 0.03125
    %v1603 = vmul.f32 %v1539, 0.03125
    %v1604 = vmul.f32 %v1540, 0.03125
    %v1605 = vmul.f32 %v1541, 0.03125
    %v1606 = vmul.f32 %v1542, 0.03125
    %v1607 = vmul.f32 %v1543, 0.03125
    %v1608 = vmul.f32 %v1544, 0.03125
    %v1609 = vmul.f32 %v1545, 0.03125
    %v1610 = vmul.f32 %v1546, 0.03125
    %v1611 = vmul.f32 %v1547, 0.03125
    %v1612 = vmul.f32 %v1548, 0.03125
    %v1613 = vmul.f32 %v1549, 0.03125
    %v1614 = vmul.f32 %v1550, 0.03125
    %v1615 = vmul.f32 %v1551, 0.03125
    %v1616 = vmul.f32 %v1552, 0.03125
    %v1617 = vmul.f32 %v1553, 0.03125
    %v1618 = vmul.f32 %v1554, 0.03125
    %v1619 = vmul.f32 %v1555, 0.03125
    %v1620 = vmul.f32 %v1556, 0.03125
    %v1621 = vmul.f32 %v1557, %v1557
    %v1622 = vmul.f32 %v1558, %v1558
    %v1623 = vmul.f32 %v1559, %v1559
    %v1624 = vmul.f32 %v1560, %v1560
    %v1625 = vmul.f32 %v1561, %v1561
    %v1626 = vmul.f32 %v1562, %v1562
    %v1627 = vmul.f32 %v1563, %v1563
    %v1628 = vmul.f32 %v1564, %v1564
    %v1629 = vmul.f32 %v1565, %v1565
    %v1630 = vmul.f32 %v1566, %v1566
    %v1631 = vmul.f32 %v1567, %v1567
    %v1632 = vmul.f32 %v1568, %v1568
    %v1633 = vmul.f32 %v1569, %v1569
    %v1634 = vmul.f32 %v1570, %v1570
    %v1635 = vmul.f32 %v1571, %v1571
    %v1636 = vmul.f32 %v1572, %v1572
    %v1637 = vmul.f32 %v1573, %v1573
    %v1638 = vmul.f32 %v1574, %v1574
    %v1639 = vmul.f32 %v1575, %v1575
    %v1640 = vmul.f32 %v1576, %v1576
    %v1641 = vmul.f32 %v1577, %v1577
    %v1642 = vmul.f32 %v1578, %v1578
    %v1643 = vmul.f32 %v1579, %v1579
    %v1644 = vmul.f32 %v1580, %v1580
    %v1645 = vmul.f32 %v1581, %v1581
    %v1646 = vmul.f32 %v1582, %v1582
    %v1647 = vmul.f32 %v1583, %v1583
    %v1648 = vmul.f32 %v1584, %v1584
    %v1649 = vmul.f32 %v1585, %v1585
    %v1650 = vmul.f32 %v1586, %v1586
    %v1651 = vmul.f32 %v1587, %v1587
    %v1652 = vmul.f32 %v1588, %v1588
    %v1653 = vsub.f32 %v1589, %v1621
    %v1654 = vsub.f32 %v1590, %v1622
    %v1655 = vsub.f32 %v1591, %v1623
    %v1656 = vsub.f32 %v1592, %v1624
    %v1657 = vsub.f32 %v1593, %v1625
    %v1658 = vsub.f32 %v1594, %v1626
    %v1659 = vsub.f32 %v1595, %v1627
    %v1660 = vsub.f32 %v1596, %v1628
    %v1661 = vsub.f32 %v1597, %v1629
    %v1662 = vsub.f32 %v1598, %v1630
    %v1663 = vsub.f32 %v1599, %v1631
    %v1664 = vsub.f32 %v1600, %v1632
    %v1665 = vsub.f32 %v1601, %v1633
    %v1666 = vsub.f32 %v1602, %v1634
    %v1667 = vsub.f32 %v1603, %v1635
    %v1668 = vsub.f32 %v1604, %v1636
    %v1669 = vsub.f32 %v1605, %v1637
    %v1670 = vsub.f32 %v1606, %v1638
    %v1671 = vsub.f32 %v1607, %v1639
    %v1672 = vsub.f32 %v1608, %v1640
    %v1673 = vsub.f32 %v1609, %v1641
    %v1674 = vsub.f32 %v1610, %v1642
    %v1675 = vsub.f32 %v1611, %v1643
    %v1676 = vsub.f32 %v1612, %v1644
    %v1677 = vsub.f32 %v1613, %v1645
    %v1678 = vsub.f32 %v1614, %v1646
    %v1679 = vsub.f32 %v1615, %v1647
    %v1680 = vsub.f32 %v1616, %v1648
    %v1681 = vsub.f32 %v1617, %v1649
    %v1682 = vsub.f32 %v1618, %v1650
    %v1683 = vsub.f32 %v1619, %v1651
    %v1684 = vsub.f32 %v1620, %v1652
    %v1685 = vmax.f32 %v1653, 0.0
    %v1686 = vmax.f32 %v1654, 0.0
    %v1687 = vmax.f32 %v1655, 0.0
    %v1688 = vmax.f32 %v1656, 0.0
    %v1689 = vmax.f32 %v1657, 0.0
    %v1690 = vmax.f32 %v1658, 0.0
    %v1691 = vmax.f32 %v1659, 0.0
    %v1692 = vmax.f32 %v1660, 0.0
    %v1693 = vmax.f32 %v1661, 0.0
    %v1694 = vmax.f32 %v1662, 0.0
    %v1695 = vmax.f32 %v1663, 0.0
    %v1696 = vmax.f32 %v1664, 0.0
    %v1697 = vmax.f32 %v1665, 0.0
    %v1698 = vmax.f32 %v1666, 0.0
    %v1699 = vmax.f32 %v1667, 0.0
    %v1700 = vmax.f32 %v1668, 0.0
    %v1701 = vmax.f32 %v1669, 0.0
    %v1702 = vmax.f32 %v1670, 0.0
    %v1703 = vmax.f32 %v1671, 0.0
    %v1704 = vmax.f32 %v1672, 0.0
    %v1705 = vmax.f32 %v1673, 0.0
    %v1706 = vmax.f32 %v1674, 0.0
    %v1707 = vmax.f32 %v1675, 0.0
    %v1708 = vmax.f32 %v1676, 0.0
    %v1709 = vmax.f32 %v1677, 0.0
    %v1710 = vmax.f32 %v1678, 0.0
    %v1711 = vmax.f32 %v1679, 0.0
    %v1712 = vmax.f32 %v1680, 0.0
    %v1713 = vmax.f32 %v1681, 0.0
    %v1714 = vmax.f32 %v1682, 0.0
    %v1715 = vmax.f32 %v1683, 0.0
    %v1716 = vmax.f32 %v1684, 0.0
    %v1717 = vadd.f32 %v1685, 1e-06
    %v1718 = vadd.f32 %v1686, 1e-06
    %v1719 = vadd.f32 %v1687, 1e-06
    %v1720 = vadd.f32 %v1688, 1e-06
    %v1721 = vadd.f32 %v1689, 1e-06
    %v1722 = vadd.f32 %v1690, 1e-06
    %v1723 = vadd.f32 %v1691, 1e-06
    %v1724 = vadd.f32 %v1692, 1e-06
    %v1725 = vadd.f32 %v1693, 1e-06
    %v1726 = vadd.f32 %v1694, 1e-06
    %v1727 = vadd.f32 %v1695, 1e-06
    %v1728 = vadd.f32 %v1696, 1e-06
    %v1729 = vadd.f32 %v1697, 1e-06
    %v1730 = vadd.f32 %v1698, 1e-06
    %v1731 = vadd.f32 %v1699, 1e-06
    %v1732 = vadd.f32 %v1700, 1e-06
    %v1733 = vadd.f32 %v1701, 1e-06
    %v1734 = vadd.f32 %v1702, 1e-06
    %v1735 = vadd.f32 %v1703, 1e-06
    %v1736 = vadd.f32 %v1704, 1e-06
    %v1737 = vadd.f32 %v1705, 1e-06
    %v1738 = vadd.f32 %v1706, 1e-06
    %v1739 = vadd.f32 %v1707, 1e-06
    %v1740 = vadd.f32 %v1708, 1e-06
    %v1741 = vadd.f32 %v1709, 1e-06
    %v1742 = vadd.f32 %v1710, 1e-06
    %v1743 = vadd.f32 %v1711, 1e-06
    %v1744 = vadd.f32 %v1712, 1e-06
    %v1745 = vadd.f32 %v1713, 1e-06
    %v1746 = vadd.f32 %v1714, 1e-06
    %v1747 = vadd.f32 %v1715, 1e-06
    %v1748 = vadd.f32 %v1716, 1e-06
    %v1749 = vrsqrt.pop %v1717
    %v1750 = vrsqrt.pop %v1718
    %v1751 = vrsqrt.pop %v1719
    %v1752 = vrsqrt.pop %v1720
    %v1753 = vrsqrt.pop %v1721
    %v1754 = vrsqrt.pop %v1722
    %v1755 = vrsqrt.pop %v1723
    %v1756 = vrsqrt.pop %v1724
    %v1757 = vrsqrt.pop %v1725
    %v1758 = vrsqrt.pop %v1726
    %v1759 = vrsqrt.pop %v1727
    %v1760 = vrsqrt.pop %v1728
    %v1761 = vrsqrt.pop %v1729
    %v1762 = vrsqrt.pop %v1730
    %v1763 = vrsqrt.pop %v1731
    %v1764 = vrsqrt.pop %v1732
    %v1765 = vrsqrt.pop %v1733
    %v1766 = vrsqrt.pop %v1734
    %v1767 = vrsqrt.pop %v1735
    %v1768 = vrsqrt.pop %v1736
    %v1769 = vrsqrt.pop %v1737
    %v1770 = vrsqrt.pop %v1738
    %v1771 = vrsqrt.pop %v1739
    %v1772 = vrsqrt.pop %v1740
    %v1773 = vrsqrt.pop %v1741
    %v1774 = vrsqrt.pop %v1742
    %v1775 = vrsqrt.pop %v1743
    %v1776 = vrsqrt.pop %v1744
    %v1777 = vrsqrt.pop %v1745
    %v1778 = vrsqrt.pop %v1746
    %v1779 = vrsqrt.pop %v1747
    %v1780 = vrsqrt.pop %v1748
    %v1781 = vld [vmem:[%s2] sm:$0x1]
    %v1782 = vld [vmem:[%s3] sm:$0x1]
    %v1783 = vsub.f32 %v47, %v1557
    %v1784 = vsub.f32 %v48, %v1558
    %v1785 = vsub.f32 %v49, %v1559
    %v1786 = vsub.f32 %v50, %v1560
    %v1787 = vsub.f32 %v51, %v1561
    %v1788 = vsub.f32 %v52, %v1562
    %v1789 = vsub.f32 %v53, %v1563
    %v1790 = vsub.f32 %v54, %v1564
    %v1791 = vsub.f32 %v55, %v1565
    %v1792 = vsub.f32 %v56, %v1566
    %v1793 = vsub.f32 %v57, %v1567
    %v1794 = vsub.f32 %v58, %v1568
    %v1795 = vsub.f32 %v59, %v1569
    %v1796 = vsub.f32 %v60, %v1570
    %v1797 = vsub.f32 %v61, %v1571
    %v1798 = vsub.f32 %v62, %v1572
    %v1799 = vsub.f32 %v63, %v1573
    %v1800 = vsub.f32 %v64, %v1574
    %v1801 = vsub.f32 %v65, %v1575
    %v1802 = vsub.f32 %v66, %v1576
    %v1803 = vsub.f32 %v67, %v1577
    %v1804 = vsub.f32 %v68, %v1578
    %v1805 = vsub.f32 %v69, %v1579
    %v1806 = vsub.f32 %v70, %v1580
    %v1807 = vsub.f32 %v71, %v1581
    %v1808 = vsub.f32 %v72, %v1582
    %v1809 = vsub.f32 %v73, %v1583
    %v1810 = vsub.f32 %v74, %v1584
    %v1811 = vsub.f32 %v75, %v1585
    %v1812 = vsub.f32 %v76, %v1586
    %v1813 = vsub.f32 %v77, %v1587
    %v1814 = vsub.f32 %v78, %v1588
    %v1816 = vlaneseq
    %v1817 = vshrl.u32 %v1816, 7
    %v1818 = vsub.s32 0, %v1817
    %v1819 = vrot.slane %v1781, %v1818
    %v1821 = vmul.f32 %v1749, %v1819
    %v1822 = vmul.f32 %v1750, %v1819
    %v1823 = vmul.f32 %v1751, %v1819
    %v1824 = vmul.f32 %v1752, %v1819
    %v1825 = vmul.f32 %v1753, %v1819
    %v1826 = vmul.f32 %v1754, %v1819
    %v1827 = vmul.f32 %v1755, %v1819
    %v1828 = vmul.f32 %v1756, %v1819
    %v1829 = vmul.f32 %v1757, %v1819
    %v1830 = vmul.f32 %v1758, %v1819
    %v1831 = vmul.f32 %v1759, %v1819
    %v1832 = vmul.f32 %v1760, %v1819
    %v1833 = vmul.f32 %v1761, %v1819
    %v1834 = vmul.f32 %v1762, %v1819
    %v1835 = vmul.f32 %v1763, %v1819
    %v1836 = vmul.f32 %v1764, %v1819
    %v1837 = vmul.f32 %v1765, %v1819
    %v1838 = vmul.f32 %v1766, %v1819
    %v1839 = vmul.f32 %v1767, %v1819
    %v1840 = vmul.f32 %v1768, %v1819
    %v1841 = vmul.f32 %v1769, %v1819
    %v1842 = vmul.f32 %v1770, %v1819
    %v1843 = vmul.f32 %v1771, %v1819
    %v1844 = vmul.f32 %v1772, %v1819
    %v1845 = vmul.f32 %v1773, %v1819
    %v1846 = vmul.f32 %v1774, %v1819
    %v1847 = vmul.f32 %v1775, %v1819
    %v1848 = vmul.f32 %v1776, %v1819
    %v1849 = vmul.f32 %v1777, %v1819
    %v1850 = vmul.f32 %v1778, %v1819
    %v1851 = vmul.f32 %v1779, %v1819
    %v1852 = vmul.f32 %v1780, %v1819
    %v1853 = vmul.f32 %v1783, %v1821
    %v1854 = vmul.f32 %v1784, %v1822
    %v1855 = vmul.f32 %v1785, %v1823
    %v1856 = vmul.f32 %v1786, %v1824
    %v1857 = vmul.f32 %v1787, %v1825
    %v1858 = vmul.f32 %v1788, %v1826
    %v1859 = vmul.f32 %v1789, %v1827
    %v1860 = vmul.f32 %v1790, %v1828
    %v1861 = vmul.f32 %v1791, %v1829
    %v1862 = vmul.f32 %v1792, %v1830
    %v1863 = vmul.f32 %v1793, %v1831
    %v1864 = vmul.f32 %v1794, %v1832
    %v1865 = vmul.f32 %v1795, %v1833
    %v1866 = vmul.f32 %v1796, %v1834
    %v1867 = vmul.f32 %v1797, %v1835
    %v1868 = vmul.f32 %v1798, %v1836
    %v1869 = vmul.f32 %v1799, %v1837
    %v1870 = vmul.f32 %v1800, %v1838
    %v1871 = vmul.f32 %v1801, %v1839
    %v1872 = vmul.f32 %v1802, %v1840
    %v1873 = vmul.f32 %v1803, %v1841
    %v1874 = vmul.f32 %v1804, %v1842
    %v1875 = vmul.f32 %v1805, %v1843
    %v1876 = vmul.f32 %v1806, %v1844
    %v1877 = vmul.f32 %v1807, %v1845
    %v1878 = vmul.f32 %v1808, %v1846
    %v1879 = vmul.f32 %v1809, %v1847
    %v1880 = vmul.f32 %v1810, %v1848
    %v1881 = vmul.f32 %v1811, %v1849
    %v1882 = vmul.f32 %v1812, %v1850
    %v1883 = vmul.f32 %v1813, %v1851
    %v1884 = vmul.f32 %v1814, %v1852
    %v1886 = vlaneseq
    %v1887 = vshrl.u32 %v1886, 7
    %v1888 = vsub.s32 0, %v1887
    %v1889 = vrot.slane %v1782, %v1888
    %v1891 = vadd.f32 %v1853, %v1889
    %v1892 = vadd.f32 %v1854, %v1889
    %v1893 = vadd.f32 %v1855, %v1889
    %v1894 = vadd.f32 %v1856, %v1889
    %v1895 = vadd.f32 %v1857, %v1889
    %v1896 = vadd.f32 %v1858, %v1889
    %v1897 = vadd.f32 %v1859, %v1889
    %v1898 = vadd.f32 %v1860, %v1889
    %v1899 = vadd.f32 %v1861, %v1889
    %v1900 = vadd.f32 %v1862, %v1889
    %v1901 = vadd.f32 %v1863, %v1889
    %v1902 = vadd.f32 %v1864, %v1889
    %v1903 = vadd.f32 %v1865, %v1889
    %v1904 = vadd.f32 %v1866, %v1889
    %v1905 = vadd.f32 %v1867, %v1889
    %v1906 = vadd.f32 %v1868, %v1889
    %v1907 = vadd.f32 %v1869, %v1889
    %v1908 = vadd.f32 %v1870, %v1889
    %v1909 = vadd.f32 %v1871, %v1889
    %v1910 = vadd.f32 %v1872, %v1889
    %v1911 = vadd.f32 %v1873, %v1889
    %v1912 = vadd.f32 %v1874, %v1889
    %v1913 = vadd.f32 %v1875, %v1889
    %v1914 = vadd.f32 %v1876, %v1889
    %v1915 = vadd.f32 %v1877, %v1889
    %v1916 = vadd.f32 %v1878, %v1889
    %v1917 = vadd.f32 %v1879, %v1889
    %v1918 = vadd.f32 %v1880, %v1889
    %v1919 = vadd.f32 %v1881, %v1889
    %v1920 = vadd.f32 %v1882, %v1889
    %v1921 = vadd.f32 %v1883, %v1889
    %v1922 = vadd.f32 %v1884, %v1889
    %1923 = vst [vmem:[#allocation7] sm:$0xff] %v1891
    %1924 = vst [vmem:[#allocation7 + $0x8] sm:$0xff] %v1892
    %1925 = vst [vmem:[#allocation7 + $0x10] sm:$0xff] %v1893
    %1926 = vst [vmem:[#allocation7 + $0x18] sm:$0xff] %v1894
    %1927 = vst [vmem:[#allocation7 + $0x20] sm:$0xff] %v1895
    %1928 = vst [vmem:[#allocation7 + $0x28] sm:$0xff] %v1896
    %1929 = vst [vmem:[#allocation7 + $0x30] sm:$0xff] %v1897
    %1930 = vst [vmem:[#allocation7 + $0x38] sm:$0xff] %v1898
    %1931 = vst [vmem:[#allocation7 + $0x40] sm:$0xff] %v1899
    %1932 = vst [vmem:[#allocation7 + $0x48] sm:$0xff] %v1900
    %1933 = vst [vmem:[#allocation7 + $0x50] sm:$0xff] %v1901
    %1934 = vst [vmem:[#allocation7 + $0x58] sm:$0xff] %v1902
    %1935 = vst [vmem:[#allocation7 + $0x60] sm:$0xff] %v1903
    %1936 = vst [vmem:[#allocation7 + $0x68] sm:$0xff] %v1904
    %1937 = vst [vmem:[#allocation7 + $0x70] sm:$0xff] %v1905
    %1938 = vst [vmem:[#allocation7 + $0x78] sm:$0xff] %v1906
    %1939 = vst [vmem:[#allocation7 + $0x80] sm:$0xff] %v1907
    %1940 = vst [vmem:[#allocation7 + $0x88] sm:$0xff] %v1908
    %1941 = vst [vmem:[#allocation7 + $0x90] sm:$0xff] %v1909
    %1942 = vst [vmem:[#allocation7 + $0x98] sm:$0xff] %v1910
    %1943 = vst [vmem:[#allocation7 + $0xa0] sm:$0xff] %v1911
    %1944 = vst [vmem:[#allocation7 + $0xa8] sm:$0xff] %v1912
    %1945 = vst [vmem:[#allocation7 + $0xb0] sm:$0xff] %v1913
    %1946 = vst [vmem:[#allocation7 + $0xb8] sm:$0xff] %v1914
    %1947 = vst [vmem:[#allocation7 + $0xc0] sm:$0xff] %v1915
    %1948 = vst [vmem:[#allocation7 + $0xc8] sm:$0xff] %v1916
    %1949 = vst [vmem:[#allocation7 + $0xd0] sm:$0xff] %v1917
    %1950 = vst [vmem:[#allocation7 + $0xd8] sm:$0xff] %v1918
    %1951 = vst [vmem:[#allocation7 + $0xe0] sm:$0xff] %v1919
    %1952 = vst [vmem:[#allocation7 + $0xe8] sm:$0xff] %v1920
    %1953 = vst [vmem:[#allocation7 + $0xf0] sm:$0xff] %v1921
    %1954 = vst [vmem:[#allocation7 + $0xf8] sm:$0xff] %v1922
    // Predicated region
    $region26: #{tpu_custom_call.1} parent=1 // pred_check
      _
    $region27: #{tpu_custom_call.1} parent=1 // pred_check_branch
      %1956 = sbr.rel (0) target = $region29
    $region28: #{tpu_custom_call.1} parent=1 // pred_region
      %s1958 = ssub.s32 4096, 4096
      %1959 = vsyncadd [#allocation4], %s1958
      %s1960 = sshll.u32 [#allocation7], 4
      %s1961 = int_to_ptr.vmem [resolvable:$true] %s1960
      %1966 = dma.vmem_to_hbm [thread:$0]  %s1961, 4096, %s4, [#allocation4], 128, 128, 8
    $region29: #{tpu_custom_call.1} parent=1 // pred_fallthru
      _
    // Predicated region
    $region30: #{tpu_custom_call.1} parent=1 // pred_check
      _
    $region31: #{tpu_custom_call.1} parent=1 // pred_check_branch
      %1968 = sbr.rel (0) target = $region33
    $region32: #{tpu_custom_call.1} parent=1 // pred_region
      %1969 = dma.done [#allocation4], 4096
    $region33: #{tpu_custom_call.1} parent=1 // pred_fallthru
      _
    %1970 = vsyncpa [#allocation3], 1
    %1971 = vsyncpa [#allocation6], 1
    %1972 = vsyncpa [#allocation4], 1

</llo_original>
